<compile_context>
chip_gen: v5e
topology: v5e:2x2
jax: 0.10.0
libtpu: 0.0.40
codegen_flags: <defaults>
</compile_context>

<pallas_src>
import functools

import jax
import jax.numpy as jnp
from jax import lax
from jax.experimental import pallas as pl
from jax.experimental.pallas import tpu as pltpu

BN_EPS = 1e-5
KH = KW = 3


# ---------------------------------------------------------------------------
# kernels
# ---------------------------------------------------------------------------
def _stats_kernel(x_ref, w_ref, sum_ref, ssq_ref, acc_ref, *, TH, Wo, Cin, Cout):
    """Pass 1: conv tile -> per-tile per-channel sum and centered sum-of-squares."""
    r = pl.program_id(1)
    row0 = r * TH
    w_a = w_ref[:, 0:6 * Cin]              # taps kh in {0,1}, columns (kh, kw, ci)
    w_b = w_ref[:, 6 * Cin:9 * Cin]        # taps kh == 2,      columns (kw, ci)
    for it in range(TH):                   # static unroll (TH kept modest by the picker)
        gi = row0 + it
        row_a = x_ref[0, gi, :, :]                 # (6*Cin, Wo) bf16
        row_b = x_ref[0, gi + 1, 0:3 * Cin, :]     # (3*Cin, Wo) bf16
        y = jnp.dot(w_a, row_a, preferred_element_type=jnp.float32)
        y = y + jnp.dot(w_b, row_b, preferred_element_type=jnp.float32)
        acc_ref[:, it * Wo:(it + 1) * Wo] = y      # static lane-offset store into scratch
    acc = acc_ref[...]                             # (Cout, TH*Wo) f32
    m = TH * Wo
    s = jnp.sum(acc, axis=1, keepdims=True)        # (Cout, 1)
    mu = s * (1.0 / m)
    d = acc - mu
    ss = jnp.sum(d * d, axis=1, keepdims=True)     # centered (stable) per-tile SS
    sum_ref[0, 0] = s
    ssq_ref[0, 0] = ss


def _apply_kernel(x_ref, w_ref, scale_ref, shift_ref, o_ref, *, TH, Wo, Cin, Cout):
    """Pass 2: recompute conv rows, apply hoisted BN affine + ReLU, lane-dense NCHW store."""
    r = pl.program_id(1)
    row0 = r * TH
    w_a = w_ref[:, 0:6 * Cin]
    w_b = w_ref[:, 6 * Cin:9 * Cin]
    scale = scale_ref[...]                 # (Cout, 1) f32
    shift = shift_ref[...]
    for it in range(TH):
        gi = row0 + it
        row_a = x_ref[0, gi, :, :]
        row_b = x_ref[0, gi + 1, 0:3 * Cin, :]
        y = jnp.dot(w_a, row_a, preferred_element_type=jnp.float32)
        y = y + jnp.dot(w_b, row_b, preferred_element_type=jnp.float32)
        y = jnp.maximum(y * scale + shift, 0.0)
        o_ref[0, :, it * Wo:(it + 1) * Wo] = y.astype(o_ref.dtype)


# ---------------------------------------------------------------------------
# wrapper helpers
# ---------------------------------------------------------------------------
def _vmem_capacity_bytes():
    try:
        info = pltpu.get_tpu_info()
        cap = getattr(info, "vmem_capacity_bytes", None)
        if cap:
            return int(cap)
    except Exception:
        pass
    return 64 << 20  # conservative (v7x per-TensorCore VMEM)


def _pick_block_rows(Ho, Wo, per_m_bytes, fixed_bytes, budget, unroll_cap=64):
    """Largest divisor of Ho whose flat tile TH*Wo is lane-dense (%128==0 or whole image)
    and whose working set fits the VMEM budget."""
    legal = [d for d in range(1, Ho + 1)
             if Ho % d == 0 and ((d * Wo) % 128 == 0 or d == Ho)]
    fits = [d for d in legal
            if d <= unroll_cap and fixed_bytes + d * Wo * per_m_bytes <= budget]
    if fits:
        return max(fits)
    # TODO(synk): pathological sizes with no small lane-dense divisor fall back to the
    # smallest legal tile (may unroll a long in-kernel row loop).
    return min(legal)


# ---------------------------------------------------------------------------
# forward
# ---------------------------------------------------------------------------
def hgstem_forward(x_nchw, weight_oihw, gamma, beta, *, block_rows=None, out_dtype=None):
    """Pallas implementation of HGStem.forward. x_nchw: (N, Cin, H, W)."""
    N, Cin, H, W = x_nchw.shape
    Cout = weight_oihw.shape[0]
    # TODO(synk): odd spatial sizes need a different tap decomposition; the usual stem
    # case (even H/W) is handled here.
    assert H % 2 == 0 and W % 2 == 0, "even spatial sizes only"
    Ho, Wo = H // 2, W // 2
    Hp = Ho + 1
    out_dtype = jnp.dtype(out_dtype or x_nchw.dtype)

    # ---- glue (input-sized only): fold the 3 column taps into channels ----------------
    # xq[n, ih, (ry*3 + kw)*Cin + ci, jw] = xpad[n, ci, 2*ih + ry, 2*jw + kw]
    # => output row i needs two contiguous slabs: row ih=i (all 6*Cin channels, kh in {0,1})
    #    and row ih=i+1 (first 3*Cin channels, kh == 2).  Minor dim is Wo (lane-dense).
    xb = x_nchw.astype(jnp.bfloat16)
    xpad = jnp.pad(xb, ((0, 0), (0, 0), (1, 1), (1, 1)))            # (N, Cin, H+2, W+2)
    xr = xpad.reshape(N, Cin, Hp, 2, Wo + 1, 2)                     # (n,ci,ih,ry,jc,rx)
    taps = jnp.stack([xr[:, :, :, :, 0:Wo, 0],                      # kw = 0
                      xr[:, :, :, :, 0:Wo, 1],                      # kw = 1
                      xr[:, :, :, :, 1:Wo + 1, 0]], axis=2)         # kw = 2
    # (n,ci,kw,ih,ry,jw) -> (n,ih,ry,kw,ci,jw) -> (N, Hp, 6*Cin, Wo)
    xq = jnp.transpose(taps, (0, 3, 4, 2, 1, 5)).reshape(N, Hp, 6 * Cin, Wo)

    # weight (Cout,Cin,3,3) -> (Cout, kh, kw, ci) -> (Cout, 9*Cin) bf16 MXU operand
    wp = jnp.transpose(weight_oihw, (0, 2, 3, 1)).reshape(Cout, KH * KW * Cin)
    wp = wp.astype(jnp.bfloat16)

    # ---- tile / VMEM budget (per generation) -------------------------------------------
    vmem_cap = _vmem_capacity_bytes()
    budget = min(int(0.45 * vmem_cap), 48 << 20)
    xblk = Hp * 6 * Cin * Wo * 2
    wblk = Cout * KH * KW * Cin * 2
    fixed = 2 * xblk + 2 * wblk + (2 << 20)
    per_m = Cout * 4 * 3                      # f32 acc scratch + double-buffered out tile
    TH = block_rows if block_rows is not None else _pick_block_rows(Ho, Wo, per_m, fixed, budget)
    assert Ho % TH == 0 and ((TH * Wo) % 128 == 0 or TH == Ho)
    R = Ho // TH
    M = TH * Wo
    need = fixed + M * per_m + (4 << 20)
    vmem_limit = int(min(max(need, 32 << 20), int(0.9 * vmem_cap)))

    x_spec = pl.BlockSpec((1, Hp, 6 * Cin, Wo), lambda n, r: (n, 0, 0, 0))
    w_spec = pl.BlockSpec((Cout, KH * KW * Cin), lambda n, r: (0, 0))

    flops = 2 * N * Ho * Wo * KH * KW * Cin * Cout
    in_bytes = xq.size * 2 + wp.size * 2

    # ---- pass 1: conv + per-tile (sum, centered sum of squares) ------------------------
    sum_t, ssq_t = pl.pallas_call(
        functools.partial(_stats_kernel, TH=TH, Wo=Wo, Cin=Cin, Cout=Cout),
        out_shape=(jax.ShapeDtypeStruct((N, R, Cout, 1), jnp.float32),
                   jax.ShapeDtypeStruct((N, R, Cout, 1), jnp.float32)),
        grid_spec=pltpu.PrefetchScalarGridSpec(
            num_scalar_prefetch=0,
            grid=(N, R),
            in_specs=[x_spec, w_spec],
            out_specs=(pl.BlockSpec((1, 1, Cout, 1), lambda n, r: (n, r, 0, 0)),
                       pl.BlockSpec((1, 1, Cout, 1), lambda n, r: (n, r, 0, 0))),
            scratch_shapes=[pltpu.VMEM((Cout, M), jnp.float32)]),
        compiler_params=pltpu.CompilerParams(
            dimension_semantics=("parallel", "parallel"),
            vmem_limit_bytes=vmem_limit),
        cost_estimate=pl.CostEstimate(
            flops=flops, transcendentals=0,
            bytes_accessed=in_bytes + 2 * N * R * Cout * 4),
    )(xq, wp)

    # ---- glue: stable cross-tile variance merge -> hoisted BN affine (Cout-sized) ------
    m_t = float(M)
    m_tot = float(N * Ho * Wo)
    sums = sum_t.reshape(N * R, Cout)
    ssqs = ssq_t.reshape(N * R, Cout)
    mean = jnp.sum(sums, axis=0) / m_tot                               # (Cout,)
    mu_t = sums / m_t
    ss = jnp.sum(ssqs, axis=0) + m_t * jnp.sum((mu_t - mean[None, :]) ** 2, axis=0)
    var = ss / m_tot                                                   # biased (training mode)
    scale = gamma.astype(jnp.float32) * lax.rsqrt(var + BN_EPS)
    shift = beta.astype(jnp.float32) - mean * scale
    scale = scale.reshape(Cout, 1)
    shift = shift.reshape(Cout, 1)

    # ---- pass 2: recompute conv rows, apply scale/shift + ReLU, NCHW(flat) output ------
    out_flat = pl.pallas_call(
        functools.partial(_apply_kernel, TH=TH, Wo=Wo, Cin=Cin, Cout=Cout),
        out_shape=jax.ShapeDtypeStruct((N, Cout, Ho * Wo), out_dtype),
        grid_spec=pltpu.PrefetchScalarGridSpec(
            num_scalar_prefetch=0,
            grid=(N, R),
            in_specs=[x_spec, w_spec,
                      pl.BlockSpec((Cout, 1), lambda n, r: (0, 0)),
                      pl.BlockSpec((Cout, 1), lambda n, r: (0, 0))],
            out_specs=pl.BlockSpec((1, Cout, M), lambda n, r: (n, 0, r))),
        compiler_params=pltpu.CompilerParams(
            dimension_semantics=("parallel", "parallel"),
            vmem_limit_bytes=vmem_limit),
        cost_estimate=pl.CostEstimate(
            flops=flops, transcendentals=0,
            bytes_accessed=in_bytes + N * Cout * Ho * Wo * out_dtype.itemsize),
    )(xq, wp, scale, shift)

    # Free flat-order reshape back to NCHW (no transpose, no extra HBM pass).
    return out_flat.reshape(N, Cout, Ho, Wo)


# ---------------------------------------------------------------------------
# pure-JAX reference for validation
# ---------------------------------------------------------------------------
def hgstem_reference(x_nchw, weight_oihw, gamma, beta, *, bf16_conv_operands=False):
    xc, wc = x_nchw, weight_oihw
    if bf16_conv_operands:  # mirror the kernel's MXU operand precision (f32 accumulation)
        xc = xc.astype(jnp.bfloat16).astype(jnp.float32)
        wc = wc.astype(jnp.bfloat16).astype(jnp.float32)
    conv = lax.conv_general_dilated(
        xc, wc, window_strides=(2, 2), padding=((1, 1), (1, 1)),
        dimension_numbers=("NCHW", "OIHW", "NCHW"),
        precision=lax.Precision.HIGHEST)
    mean = jnp.mean(conv, axis=(0, 2, 3), keepdims=True)
    var = jnp.mean((conv - mean) ** 2, axis=(0, 2, 3), keepdims=True)
    y = (conv - mean) * lax.rsqrt(var + BN_EPS)
    y = y * gamma.reshape(1, -1, 1, 1) + beta.reshape(1, -1, 1, 1)
    return jnp.maximum(y, 0.0)


if __name__ == "__main__":
    # Small shapes consistent with the module: batch=2, in_channels=4, 16x16 spatial,
    # out_channels=32.
    N, Cin, H, W = 2, 4, 16, 16
    Cout = 32

    key = jax.random.PRNGKey(0)
    kx, kw, kg, kb = jax.random.split(key, 4)
    x = jax.random.normal(kx, (N, Cin, H, W), dtype=jnp.float32)
    weight = jax.random.normal(kw, (Cout, Cin, 3, 3), dtype=jnp.float32) * 0.1
    gamma = 1.0 + 0.1 * jax.random.normal(kg, (Cout,), dtype=jnp.float32)
    beta = 0.1 * jax.random.normal(kb, (Cout,), dtype=jnp.float32)

    fwd = jax.jit(lambda a, b, c, d: hgstem_forward(a, b, c, d))
    out = jax.block_until_ready(fwd(x, weight, gamma, beta))
    assert out.shape == (N, Cout, H // 2, W // 2), out.shape

    # Tight check vs a reference with matching conv-operand precision (bf16 in, f32 acc).
    ref_match = jax.block_until_ready(
        hgstem_reference(x, weight, gamma, beta, bf16_conv_operands=True))
    assert jnp.allclose(out, ref_match, atol=2e-3, rtol=2e-3), \
        float(jnp.max(jnp.abs(out - ref_match)))

    # Loose semantic check vs the pure-f32 module reference (bf16 MXU operands in kernel).
    ref_f32 = jax.block_until_ready(hgstem_reference(x, weight, gamma, beta))
    assert jnp.allclose(out, ref_f32, atol=1e-1, rtol=1e-1), \
        float(jnp.max(jnp.abs(out - ref_f32)))

    print("KERNEL_OK")
</pallas_src>

<mosaic_0001>
module attributes {stable_mosaic.version = 11 : i64} {
  func.func @_stats_kernel(%arg0: i32, %arg1: i32, %arg2: memref<1x9x24x8xbf16, #tpu.memory_space<vmem>>, %arg3: memref<32x36xbf16, #tpu.memory_space<vmem>>, %arg4: memref<1x1x32x1xf32, #tpu.memory_space<vmem>>, %arg5: memref<1x1x32x1xf32, #tpu.memory_space<vmem>>, %arg6: memref<32x64xf32, #tpu.memory_space<vmem>>) attributes {dimension_semantics = [#tpu.dimension_semantics<parallel>, #tpu.dimension_semantics<parallel>], iteration_bounds = array<i64: 2, 1>, scalar_prefetch = 0 : i64, scratch_operands = 1 : i64, tpu.core_type = #tpu.core_type<tc>, window_params = [{transform_indices = @transform_0, window_bounds = array<i64: 1, 9, 24, 8>}, {pipeline_mode = #tpu.pipeline_mode<synchronous>, transform_indices = @transform_1, window_bounds = array<i64: 32, 36>}, {transform_indices = @transform_2, window_bounds = array<i64: 1, 1, 32, 1>}, {transform_indices = @transform_3, window_bounds = array<i64: 1, 1, 32, 1>}]} {
    %c8_i32 = arith.constant 8 : i32
    %0 = arith.muli %arg1, %c8_i32 : i32
    %c0 = arith.constant 0 : index
    %c0_0 = arith.constant 0 : index
    %1 = vector.load %arg3[%c0, %c0_0] : memref<32x36xbf16, #tpu.memory_space<vmem>>, vector<32x24xbf16>
    %c0_1 = arith.constant 0 : index
    %c24 = arith.constant 24 : index
    %2 = vector.load %arg3[%c0_1, %c24] : memref<32x36xbf16, #tpu.memory_space<vmem>>, vector<32x12xbf16>
    %c0_i32 = arith.constant 0 : i32
    %3 = arith.addi %0, %c0_i32 : i32
    %c0_2 = arith.constant 0 : index
    %4 = arith.index_cast %3 : i32 to index
    %c0_3 = arith.constant 0 : index
    %c0_4 = arith.constant 0 : index
    %5 = vector.load %arg2[%c0_2, %4, %c0_3, %c0_4] : memref<1x9x24x8xbf16, #tpu.memory_space<vmem>>, vector<1x1x24x8xbf16>
    %6 = vector.shape_cast %5 : vector<1x1x24x8xbf16> to vector<24x8xbf16>
    %c1_i32 = arith.constant 1 : i32
    %7 = arith.addi %3, %c1_i32 : i32
    %c0_5 = arith.constant 0 : index
    %8 = arith.index_cast %7 : i32 to index
    %c0_6 = arith.constant 0 : index
    %c0_7 = arith.constant 0 : index
    %9 = vector.load %arg2[%c0_5, %8, %c0_6, %c0_7] : memref<1x9x24x8xbf16, #tpu.memory_space<vmem>>, vector<1x1x12x8xbf16>
    %10 = vector.shape_cast %9 : vector<1x1x12x8xbf16> to vector<12x8xbf16>
    %cst = arith.constant dense<0.000000e+00> : vector<32x8xf32>
    %11 = tpu.matmul %1, %6, %cst {dimension_numbers = #tpu.dot_dimension_numbers<[1], [0], [0], [1], [0, 0, 1, 1], [], []>} : vector<32x24xbf16>, vector<24x8xbf16>, vector<32x8xf32> -> vector<32x8xf32>
    %cst_8 = arith.constant dense<0.000000e+00> : vector<32x8xf32>
    %12 = tpu.matmul %2, %10, %cst_8 {dimension_numbers = #tpu.dot_dimension_numbers<[1], [0], [0], [1], [0, 0, 1, 1], [], []>} : vector<32x12xbf16>, vector<12x8xbf16>, vector<32x8xf32> -> vector<32x8xf32>
    %13 = arith.addf %11, %12 : vector<32x8xf32>
    %c0_9 = arith.constant 0 : index
    %c0_10 = arith.constant 0 : index
    %14 = vector.load %arg6[%c0_9, %c0_10] : memref<32x64xf32, #tpu.memory_space<vmem>>, vector<32x8xf32>
    tpu.vector_store %arg6[%c0_9, %c0_10], %13 {strides = array<i32>} : memref<32x64xf32, #tpu.memory_space<vmem>>, vector<32x8xf32>,
    %c1_i32_11 = arith.constant 1 : i32
    %15 = arith.addi %0, %c1_i32_11 : i32
    %c0_12 = arith.constant 0 : index
    %16 = arith.index_cast %15 : i32 to index
    %c0_13 = arith.constant 0 : index
    %c0_14 = arith.constant 0 : index
    %17 = vector.load %arg2[%c0_12, %16, %c0_13, %c0_14] : memref<1x9x24x8xbf16, #tpu.memory_space<vmem>>, vector<1x1x24x8xbf16>
    %18 = vector.shape_cast %17 : vector<1x1x24x8xbf16> to vector<24x8xbf16>
    %c1_i32_15 = arith.constant 1 : i32
    %19 = arith.addi %15, %c1_i32_15 : i32
    %c0_16 = arith.constant 0 : index
    %20 = arith.index_cast %19 : i32 to index
    %c0_17 = arith.constant 0 : index
    %c0_18 = arith.constant 0 : index
    %21 = vector.load %arg2[%c0_16, %20, %c0_17, %c0_18] : memref<1x9x24x8xbf16, #tpu.memory_space<vmem>>, vector<1x1x12x8xbf16>
    %22 = vector.shape_cast %21 : vector<1x1x12x8xbf16> to vector<12x8xbf16>
    %cst_19 = arith.constant dense<0.000000e+00> : vector<32x8xf32>
    %23 = tpu.matmul %1, %18, %cst_19 {dimension_numbers = #tpu.dot_dimension_numbers<[1], [0], [0], [1], [0, 0, 1, 1], [], []>} : vector<32x24xbf16>, vector<24x8xbf16>, vector<32x8xf32> -> vector<32x8xf32>
    %cst_20 = arith.constant dense<0.000000e+00> : vector<32x8xf32>
    %24 = tpu.matmul %2, %22, %cst_20 {dimension_numbers = #tpu.dot_dimension_numbers<[1], [0], [0], [1], [0, 0, 1, 1], [], []>} : vector<32x12xbf16>, vector<12x8xbf16>, vector<32x8xf32> -> vector<32x8xf32>
    %25 = arith.addf %23, %24 : vector<32x8xf32>
    %c0_21 = arith.constant 0 : index
    %c8 = arith.constant 8 : index
    %26 = vector.load %arg6[%c0_21, %c8] : memref<32x64xf32, #tpu.memory_space<vmem>>, vector<32x8xf32>
    tpu.vector_store %arg6[%c0_21, %c8], %25 {strides = array<i32>} : memref<32x64xf32, #tpu.memory_space<vmem>>, vector<32x8xf32>,
    %c2_i32 = arith.constant 2 : i32
    %27 = arith.addi %0, %c2_i32 : i32
    %c0_22 = arith.constant 0 : index
    %28 = arith.index_cast %27 : i32 to index
    %c0_23 = arith.constant 0 : index
    %c0_24 = arith.constant 0 : index
    %29 = vector.load %arg2[%c0_22, %28, %c0_23, %c0_24] : memref<1x9x24x8xbf16, #tpu.memory_space<vmem>>, vector<1x1x24x8xbf16>
    %30 = vector.shape_cast %29 : vector<1x1x24x8xbf16> to vector<24x8xbf16>
    %c1_i32_25 = arith.constant 1 : i32
    %31 = arith.addi %27, %c1_i32_25 : i32
    %c0_26 = arith.constant 0 : index
    %32 = arith.index_cast %31 : i32 to index
    %c0_27 = arith.constant 0 : index
    %c0_28 = arith.constant 0 : index
    %33 = vector.load %arg2[%c0_26, %32, %c0_27, %c0_28] : memref<1x9x24x8xbf16, #tpu.memory_space<vmem>>, vector<1x1x12x8xbf16>
    %34 = vector.shape_cast %33 : vector<1x1x12x8xbf16> to vector<12x8xbf16>
    %cst_29 = arith.constant dense<0.000000e+00> : vector<32x8xf32>
    %35 = tpu.matmul %1, %30, %cst_29 {dimension_numbers = #tpu.dot_dimension_numbers<[1], [0], [0], [1], [0, 0, 1, 1], [], []>} : vector<32x24xbf16>, vector<24x8xbf16>, vector<32x8xf32> -> vector<32x8xf32>
    %cst_30 = arith.constant dense<0.000000e+00> : vector<32x8xf32>
    %36 = tpu.matmul %2, %34, %cst_30 {dimension_numbers = #tpu.dot_dimension_numbers<[1], [0], [0], [1], [0, 0, 1, 1], [], []>} : vector<32x12xbf16>, vector<12x8xbf16>, vector<32x8xf32> -> vector<32x8xf32>
    %37 = arith.addf %35, %36 : vector<32x8xf32>
    %c0_31 = arith.constant 0 : index
    %c16 = arith.constant 16 : index
    %38 = vector.load %arg6[%c0_31, %c16] : memref<32x64xf32, #tpu.memory_space<vmem>>, vector<32x8xf32>
    tpu.vector_store %arg6[%c0_31, %c16], %37 {strides = array<i32>} : memref<32x64xf32, #tpu.memory_space<vmem>>, vector<32x8xf32>,
    %c3_i32 = arith.constant 3 : i32
    %39 = arith.addi %0, %c3_i32 : i32
    %c0_32 = arith.constant 0 : index
    %40 = arith.index_cast %39 : i32 to index
    %c0_33 = arith.constant 0 : index
    %c0_34 = arith.constant 0 : index
    %41 = vector.load %arg2[%c0_32, %40, %c0_33, %c0_34] : memref<1x9x24x8xbf16, #tpu.memory_space<vmem>>, vector<1x1x24x8xbf16>
    %42 = vector.shape_cast %41 : vector<1x1x24x8xbf16> to vector<24x8xbf16>
    %c1_i32_35 = arith.constant 1 : i32
    %43 = arith.addi %39, %c1_i32_35 : i32
    %c0_36 = arith.constant 0 : index
    %44 = arith.index_cast %43 : i32 to index
    %c0_37 = arith.constant 0 : index
    %c0_38 = arith.constant 0 : index
    %45 = vector.load %arg2[%c0_36, %44, %c0_37, %c0_38] : memref<1x9x24x8xbf16, #tpu.memory_space<vmem>>, vector<1x1x12x8xbf16>
    %46 = vector.shape_cast %45 : vector<1x1x12x8xbf16> to vector<12x8xbf16>
    %cst_39 = arith.constant dense<0.000000e+00> : vector<32x8xf32>
    %47 = tpu.matmul %1, %42, %cst_39 {dimension_numbers = #tpu.dot_dimension_numbers<[1], [0], [0], [1], [0, 0, 1, 1], [], []>} : vector<32x24xbf16>, vector<24x8xbf16>, vector<32x8xf32> -> vector<32x8xf32>
    %cst_40 = arith.constant dense<0.000000e+00> : vector<32x8xf32>
    %48 = tpu.matmul %2, %46, %cst_40 {dimension_numbers = #tpu.dot_dimension_numbers<[1], [0], [0], [1], [0, 0, 1, 1], [], []>} : vector<32x12xbf16>, vector<12x8xbf16>, vector<32x8xf32> -> vector<32x8xf32>
    %49 = arith.addf %47, %48 : vector<32x8xf32>
    %c0_41 = arith.constant 0 : index
    %c24_42 = arith.constant 24 : index
    %50 = vector.load %arg6[%c0_41, %c24_42] : memref<32x64xf32, #tpu.memory_space<vmem>>, vector<32x8xf32>
    tpu.vector_store %arg6[%c0_41, %c24_42], %49 {strides = array<i32>} : memref<32x64xf32, #tpu.memory_space<vmem>>, vector<32x8xf32>,
    %c4_i32 = arith.constant 4 : i32
    %51 = arith.addi %0, %c4_i32 : i32
    %c0_43 = arith.constant 0 : index
    %52 = arith.index_cast %51 : i32 to index
    %c0_44 = arith.constant 0 : index
    %c0_45 = arith.constant 0 : index
    %53 = vector.load %arg2[%c0_43, %52, %c0_44, %c0_45] : memref<1x9x24x8xbf16, #tpu.memory_space<vmem>>, vector<1x1x24x8xbf16>
    %54 = vector.shape_cast %53 : vector<1x1x24x8xbf16> to vector<24x8xbf16>
    %c1_i32_46 = arith.constant 1 : i32
    %55 = arith.addi %51, %c1_i32_46 : i32
    %c0_47 = arith.constant 0 : index
    %56 = arith.index_cast %55 : i32 to index
    %c0_48 = arith.constant 0 : index
    %c0_49 = arith.constant 0 : index
    %57 = vector.load %arg2[%c0_47, %56, %c0_48, %c0_49] : memref<1x9x24x8xbf16, #tpu.memory_space<vmem>>, vector<1x1x12x8xbf16>
    %58 = vector.shape_cast %57 : vector<1x1x12x8xbf16> to vector<12x8xbf16>
    %cst_50 = arith.constant dense<0.000000e+00> : vector<32x8xf32>
    %59 = tpu.matmul %1, %54, %cst_50 {dimension_numbers = #tpu.dot_dimension_numbers<[1], [0], [0], [1], [0, 0, 1, 1], [], []>} : vector<32x24xbf16>, vector<24x8xbf16>, vector<32x8xf32> -> vector<32x8xf32>
    %cst_51 = arith.constant dense<0.000000e+00> : vector<32x8xf32>
    %60 = tpu.matmul %2, %58, %cst_51 {dimension_numbers = #tpu.dot_dimension_numbers<[1], [0], [0], [1], [0, 0, 1, 1], [], []>} : vector<32x12xbf16>, vector<12x8xbf16>, vector<32x8xf32> -> vector<32x8xf32>
    %61 = arith.addf %59, %60 : vector<32x8xf32>
    %c0_52 = arith.constant 0 : index
    %c32 = arith.constant 32 : index
    %62 = vector.load %arg6[%c0_52, %c32] : memref<32x64xf32, #tpu.memory_space<vmem>>, vector<32x8xf32>
    tpu.vector_store %arg6[%c0_52, %c32], %61 {strides = array<i32>} : memref<32x64xf32, #tpu.memory_space<vmem>>, vector<32x8xf32>,
    %c5_i32 = arith.constant 5 : i32
    %63 = arith.addi %0, %c5_i32 : i32
    %c0_53 = arith.constant 0 : index
    %64 = arith.index_cast %63 : i32 to index
    %c0_54 = arith.constant 0 : index
    %c0_55 = arith.constant 0 : index
    %65 = vector.load %arg2[%c0_53, %64, %c0_54, %c0_55] : memref<1x9x24x8xbf16, #tpu.memory_space<vmem>>, vector<1x1x24x8xbf16>
    %66 = vector.shape_cast %65 : vector<1x1x24x8xbf16> to vector<24x8xbf16>
    %c1_i32_56 = arith.constant 1 : i32
    %67 = arith.addi %63, %c1_i32_56 : i32
    %c0_57 = arith.constant 0 : index
    %68 = arith.index_cast %67 : i32 to index
    %c0_58 = arith.constant 0 : index
    %c0_59 = arith.constant 0 : index
    %69 = vector.load %arg2[%c0_57, %68, %c0_58, %c0_59] : memref<1x9x24x8xbf16, #tpu.memory_space<vmem>>, vector<1x1x12x8xbf16>
    %70 = vector.shape_cast %69 : vector<1x1x12x8xbf16> to vector<12x8xbf16>
    %cst_60 = arith.constant dense<0.000000e+00> : vector<32x8xf32>
    %71 = tpu.matmul %1, %66, %cst_60 {dimension_numbers = #tpu.dot_dimension_numbers<[1], [0], [0], [1], [0, 0, 1, 1], [], []>} : vector<32x24xbf16>, vector<24x8xbf16>, vector<32x8xf32> -> vector<32x8xf32>
    %cst_61 = arith.constant dense<0.000000e+00> : vector<32x8xf32>
    %72 = tpu.matmul %2, %70, %cst_61 {dimension_numbers = #tpu.dot_dimension_numbers<[1], [0], [0], [1], [0, 0, 1, 1], [], []>} : vector<32x12xbf16>, vector<12x8xbf16>, vector<32x8xf32> -> vector<32x8xf32>
    %73 = arith.addf %71, %72 : vector<32x8xf32>
    %c0_62 = arith.constant 0 : index
    %c40 = arith.constant 40 : index
    %74 = vector.load %arg6[%c0_62, %c40] : memref<32x64xf32, #tpu.memory_space<vmem>>, vector<32x8xf32>
    tpu.vector_store %arg6[%c0_62, %c40], %73 {strides = array<i32>} : memref<32x64xf32, #tpu.memory_space<vmem>>, vector<32x8xf32>,
    %c6_i32 = arith.constant 6 : i32
    %75 = arith.addi %0, %c6_i32 : i32
    %c0_63 = arith.constant 0 : index
    %76 = arith.index_cast %75 : i32 to index
    %c0_64 = arith.constant 0 : index
    %c0_65 = arith.constant 0 : index
    %77 = vector.load %arg2[%c0_63, %76, %c0_64, %c0_65] : memref<1x9x24x8xbf16, #tpu.memory_space<vmem>>, vector<1x1x24x8xbf16>
    %78 = vector.shape_cast %77 : vector<1x1x24x8xbf16> to vector<24x8xbf16>
    %c1_i32_66 = arith.constant 1 : i32
    %79 = arith.addi %75, %c1_i32_66 : i32
    %c0_67 = arith.constant 0 : index
    %80 = arith.index_cast %79 : i32 to index
    %c0_68 = arith.constant 0 : index
    %c0_69 = arith.constant 0 : index
    %81 = vector.load %arg2[%c0_67, %80, %c0_68, %c0_69] : memref<1x9x24x8xbf16, #tpu.memory_space<vmem>>, vector<1x1x12x8xbf16>
    %82 = vector.shape_cast %81 : vector<1x1x12x8xbf16> to vector<12x8xbf16>
    %cst_70 = arith.constant dense<0.000000e+00> : vector<32x8xf32>
    %83 = tpu.matmul %1, %78, %cst_70 {dimension_numbers = #tpu.dot_dimension_numbers<[1], [0], [0], [1], [0, 0, 1, 1], [], []>} : vector<32x24xbf16>, vector<24x8xbf16>, vector<32x8xf32> -> vector<32x8xf32>
    %cst_71 = arith.constant dense<0.000000e+00> : vector<32x8xf32>
    %84 = tpu.matmul %2, %82, %cst_71 {dimension_numbers = #tpu.dot_dimension_numbers<[1], [0], [0], [1], [0, 0, 1, 1], [], []>} : vector<32x12xbf16>, vector<12x8xbf16>, vector<32x8xf32> -> vector<32x8xf32>
    %85 = arith.addf %83, %84 : vector<32x8xf32>
    %c0_72 = arith.constant 0 : index
    %c48 = arith.constant 48 : index
    %86 = vector.load %arg6[%c0_72, %c48] : memref<32x64xf32, #tpu.memory_space<vmem>>, vector<32x8xf32>
    tpu.vector_store %arg6[%c0_72, %c48], %85 {strides = array<i32>} : memref<32x64xf32, #tpu.memory_space<vmem>>, vector<32x8xf32>,
    %c7_i32 = arith.constant 7 : i32
    %87 = arith.addi %0, %c7_i32 : i32
    %c0_73 = arith.constant 0 : index
    %88 = arith.index_cast %87 : i32 to index
    %c0_74 = arith.constant 0 : index
    %c0_75 = arith.constant 0 : index
    %89 = vector.load %arg2[%c0_73, %88, %c0_74, %c0_75] : memref<1x9x24x8xbf16, #tpu.memory_space<vmem>>, vector<1x1x24x8xbf16>
    %90 = vector.shape_cast %89 : vector<1x1x24x8xbf16> to vector<24x8xbf16>
    %c1_i32_76 = arith.constant 1 : i32
    %91 = arith.addi %87, %c1_i32_76 : i32
    %c0_77 = arith.constant 0 : index
    %92 = arith.index_cast %91 : i32 to index
    %c0_78 = arith.constant 0 : index
    %c0_79 = arith.constant 0 : index
    %93 = vector.load %arg2[%c0_77, %92, %c0_78, %c0_79] : memref<1x9x24x8xbf16, #tpu.memory_space<vmem>>, vector<1x1x12x8xbf16>
    %94 = vector.shape_cast %93 : vector<1x1x12x8xbf16> to vector<12x8xbf16>
    %cst_80 = arith.constant dense<0.000000e+00> : vector<32x8xf32>
    %95 = tpu.matmul %1, %90, %cst_80 {dimension_numbers = #tpu.dot_dimension_numbers<[1], [0], [0], [1], [0, 0, 1, 1], [], []>} : vector<32x24xbf16>, vector<24x8xbf16>, vector<32x8xf32> -> vector<32x8xf32>
    %cst_81 = arith.constant dense<0.000000e+00> : vector<32x8xf32>
    %96 = tpu.matmul %2, %94, %cst_81 {dimension_numbers = #tpu.dot_dimension_numbers<[1], [0], [0], [1], [0, 0, 1, 1], [], []>} : vector<32x12xbf16>, vector<12x8xbf16>, vector<32x8xf32> -> vector<32x8xf32>
    %97 = arith.addf %95, %96 : vector<32x8xf32>
    %c0_82 = arith.constant 0 : index
    %c56 = arith.constant 56 : index
    %98 = vector.load %arg6[%c0_82, %c56] : memref<32x64xf32, #tpu.memory_space<vmem>>, vector<32x8xf32>
    tpu.vector_store %arg6[%c0_82, %c56], %97 {strides = array<i32>} : memref<32x64xf32, #tpu.memory_space<vmem>>, vector<32x8xf32>,
    %c0_83 = arith.constant 0 : index
    %c0_84 = arith.constant 0 : index
    %99 = vector.load %arg6[%c0_83, %c0_84] : memref<32x64xf32, #tpu.memory_space<vmem>>, vector<32x64xf32>
    %cst_85 = arith.constant dense<0.000000e+00> : vector<32xf32>
    %100 = vector.multi_reduction <add>, %99, %cst_85 [1] : vector<32x64xf32> to vector<32xf32>
    %101 = vector.shape_cast %100 : vector<32xf32> to vector<32x1xf32>
    %cst_86 = arith.constant 1.562500e-02 : f32
    %102 = vector.broadcast %cst_86 : f32 to vector<32x1xf32>
    %103 = arith.mulf %101, %102 : vector<32x1xf32>
    %104 = vector.broadcast %103 : vector<32x1xf32> to vector<32x64xf32>
    %105 = arith.subf %99, %104 : vector<32x64xf32>
    %106 = arith.mulf %105, %105 : vector<32x64xf32>
    %cst_87 = arith.constant dense<0.000000e+00> : vector<32xf32>
    %107 = vector.multi_reduction <add>, %106, %cst_87 [1] : vector<32x64xf32> to vector<32xf32>
    %108 = vector.shape_cast %107 : vector<32xf32> to vector<32x1xf32>
    %c0_88 = arith.constant 0 : index
    %c0_89 = arith.constant 0 : index
    %c0_90 = arith.constant 0 : index
    %c0_91 = arith.constant 0 : index
    %109 = vector.load %arg4[%c0_88, %c0_89, %c0_90, %c0_91] : memref<1x1x32x1xf32, #tpu.memory_space<vmem>>, vector<1x1x32x1xf32>
    %110 = vector.shape_cast %109 : vector<1x1x32x1xf32> to vector<32x1xf32>
    %111 = vector.shape_cast %101 : vector<32x1xf32> to vector<1x1x32x1xf32>
    tpu.vector_store %arg4[%c0_88, %c0_89, %c0_90, %c0_91], %111 {strides = array<i32>} : memref<1x1x32x1xf32, #tpu.memory_space<vmem>>, vector<1x1x32x1xf32>,
    %c0_92 = arith.constant 0 : index
    %c0_93 = arith.constant 0 : index
    %c0_94 = arith.constant 0 : index
    %c0_95 = arith.constant 0 : index
    %112 = vector.load %arg5[%c0_92, %c0_93, %c0_94, %c0_95] : memref<1x1x32x1xf32, #tpu.memory_space<vmem>>, vector<1x1x32x1xf32>
    %113 = vector.shape_cast %112 : vector<1x1x32x1xf32> to vector<32x1xf32>
    %114 = vector.shape_cast %108 : vector<32x1xf32> to vector<1x1x32x1xf32>
    tpu.vector_store %arg5[%c0_92, %c0_93, %c0_94, %c0_95], %114 {strides = array<i32>} : memref<1x1x32x1xf32, #tpu.memory_space<vmem>>, vector<1x1x32x1xf32>,
    return
  }
  func.func @transform_0(%arg0: i32, %arg1: i32) -> (i32, i32, i32, i32) {
    %c0_i32 = arith.constant 0 : i32
    %c0_i32_0 = arith.constant 0 : i32
    %c0_i32_1 = arith.constant 0 : i32
    %c0_i32_2 = arith.constant 0 : i32
    return %arg0, %c0_i32, %c0_i32_0, %c0_i32_1 : i32, i32, i32, i32
  }
  func.func @transform_1(%arg0: i32, %arg1: i32) -> (i32, i32) {
    %c0_i32 = arith.constant 0 : i32
    %c0_i32_0 = arith.constant 0 : i32
    %c0_i32_1 = arith.constant 0 : i32
    return %c0_i32, %c0_i32_0 : i32, i32
  }
  func.func @transform_2(%arg0: i32, %arg1: i32) -> (i32, i32, i32, i32) {
    %c0_i32 = arith.constant 0 : i32
    %c0_i32_0 = arith.constant 0 : i32
    %c0_i32_1 = arith.constant 0 : i32
    return %arg0, %arg1, %c0_i32, %c0_i32_0 : i32, i32, i32, i32
  }
  func.func @transform_3(%arg0: i32, %arg1: i32) -> (i32, i32, i32, i32) {
    %c0_i32 = arith.constant 0 : i32
    %c0_i32_0 = arith.constant 0 : i32
    %c0_i32_1 = arith.constant 0 : i32
    return %arg0, %arg1, %c0_i32, %c0_i32_0 : i32, i32, i32, i32
  }
}

module attributes {stable_mosaic.version = 11 : i64} {
  func.func @_apply_kernel(%arg0: i32, %arg1: i32, %arg2: memref<1x9x24x8xbf16, #tpu.memory_space<vmem>>, %arg3: memref<32x36xbf16, #tpu.memory_space<vmem>>, %arg4: memref<32x1xf32, #tpu.memory_space<vmem>>, %arg5: memref<32x1xf32, #tpu.memory_space<vmem>>, %arg6: memref<1x32x64xf32, #tpu.memory_space<vmem>>) attributes {dimension_semantics = [#tpu.dimension_semantics<parallel>, #tpu.dimension_semantics<parallel>], iteration_bounds = array<i64: 2, 1>, scalar_prefetch = 0 : i64, scratch_operands = 0 : i64, tpu.core_type = #tpu.core_type<tc>, window_params = [{transform_indices = @transform_0, window_bounds = array<i64: 1, 9, 24, 8>}, {pipeline_mode = #tpu.pipeline_mode<synchronous>, transform_indices = @transform_1, window_bounds = array<i64: 32, 36>}, {pipeline_mode = #tpu.pipeline_mode<synchronous>, transform_indices = @transform_2, window_bounds = array<i64: 32, 1>}, {pipeline_mode = #tpu.pipeline_mode<synchronous>, transform_indices = @transform_3, window_bounds = array<i64: 32, 1>}, {transform_indices = @transform_4, window_bounds = array<i64: 1, 32, 64>}]} {
    %c8_i32 = arith.constant 8 : i32
    %0 = arith.muli %arg1, %c8_i32 : i32
    %c0 = arith.constant 0 : index
    %c0_0 = arith.constant 0 : index
    %1 = vector.load %arg3[%c0, %c0_0] : memref<32x36xbf16, #tpu.memory_space<vmem>>, vector<32x24xbf16>
    %c0_1 = arith.constant 0 : index
    %c24 = arith.constant 24 : index
    %2 = vector.load %arg3[%c0_1, %c24] : memref<32x36xbf16, #tpu.memory_space<vmem>>, vector<32x12xbf16>
    %c0_2 = arith.constant 0 : index
    %c0_3 = arith.constant 0 : index
    %3 = vector.load %arg4[%c0_2, %c0_3] : memref<32x1xf32, #tpu.memory_space<vmem>>, vector<32x1xf32>
    %c0_4 = arith.constant 0 : index
    %c0_5 = arith.constant 0 : index
    %4 = vector.load %arg5[%c0_4, %c0_5] : memref<32x1xf32, #tpu.memory_space<vmem>>, vector<32x1xf32>
    %c0_i32 = arith.constant 0 : i32
    %5 = arith.addi %0, %c0_i32 : i32
    %c0_6 = arith.constant 0 : index
    %6 = arith.index_cast %5 : i32 to index
    %c0_7 = arith.constant 0 : index
    %c0_8 = arith.constant 0 : index
    %7 = vector.load %arg2[%c0_6, %6, %c0_7, %c0_8] : memref<1x9x24x8xbf16, #tpu.memory_space<vmem>>, vector<1x1x24x8xbf16>
    %8 = vector.shape_cast %7 : vector<1x1x24x8xbf16> to vector<24x8xbf16>
    %c1_i32 = arith.constant 1 : i32
    %9 = arith.addi %5, %c1_i32 : i32
    %c0_9 = arith.constant 0 : index
    %10 = arith.index_cast %9 : i32 to index
    %c0_10 = arith.constant 0 : index
    %c0_11 = arith.constant 0 : index
    %11 = vector.load %arg2[%c0_9, %10, %c0_10, %c0_11] : memref<1x9x24x8xbf16, #tpu.memory_space<vmem>>, vector<1x1x12x8xbf16>
    %12 = vector.shape_cast %11 : vector<1x1x12x8xbf16> to vector<12x8xbf16>
    %cst = arith.constant dense<0.000000e+00> : vector<32x8xf32>
    %13 = tpu.matmul %1, %8, %cst {dimension_numbers = #tpu.dot_dimension_numbers<[1], [0], [0], [1], [0, 0, 1, 1], [], []>} : vector<32x24xbf16>, vector<24x8xbf16>, vector<32x8xf32> -> vector<32x8xf32>
    %cst_12 = arith.constant dense<0.000000e+00> : vector<32x8xf32>
    %14 = tpu.matmul %2, %12, %cst_12 {dimension_numbers = #tpu.dot_dimension_numbers<[1], [0], [0], [1], [0, 0, 1, 1], [], []>} : vector<32x12xbf16>, vector<12x8xbf16>, vector<32x8xf32> -> vector<32x8xf32>
    %15 = arith.addf %13, %14 : vector<32x8xf32>
    %16 = vector.broadcast %3 : vector<32x1xf32> to vector<32x8xf32>
    %17 = arith.mulf %15, %16 : vector<32x8xf32>
    %18 = vector.broadcast %4 : vector<32x1xf32> to vector<32x8xf32>
    %19 = arith.addf %17, %18 : vector<32x8xf32>
    %cst_13 = arith.constant 0.000000e+00 : f32
    %20 = vector.broadcast %cst_13 : f32 to vector<32x8xf32>
    %21 = arith.maximumf %19, %20 : vector<32x8xf32>
    %c0_14 = arith.constant 0 : index
    %c0_15 = arith.constant 0 : index
    %c0_16 = arith.constant 0 : index
    %22 = vector.load %arg6[%c0_14, %c0_15, %c0_16] : memref<1x32x64xf32, #tpu.memory_space<vmem>>, vector<1x32x8xf32>
    %23 = vector.shape_cast %22 : vector<1x32x8xf32> to vector<32x8xf32>
    %24 = vector.shape_cast %21 : vector<32x8xf32> to vector<1x32x8xf32>
    tpu.vector_store %arg6[%c0_14, %c0_15, %c0_16], %24 {strides = array<i32>} : memref<1x32x64xf32, #tpu.memory_space<vmem>>, vector<1x32x8xf32>,
    %c1_i32_17 = arith.constant 1 : i32
    %25 = arith.addi %0, %c1_i32_17 : i32
    %c0_18 = arith.constant 0 : index
    %26 = arith.index_cast %25 : i32 to index
    %c0_19 = arith.constant 0 : index
    %c0_20 = arith.constant 0 : index
    %27 = vector.load %arg2[%c0_18, %26, %c0_19, %c0_20] : memref<1x9x24x8xbf16, #tpu.memory_space<vmem>>, vector<1x1x24x8xbf16>
    %28 = vector.shape_cast %27 : vector<1x1x24x8xbf16> to vector<24x8xbf16>
    %c1_i32_21 = arith.constant 1 : i32
    %29 = arith.addi %25, %c1_i32_21 : i32
    %c0_22 = arith.constant 0 : index
    %30 = arith.index_cast %29 : i32 to index
    %c0_23 = arith.constant 0 : index
    %c0_24 = arith.constant 0 : index
    %31 = vector.load %arg2[%c0_22, %30, %c0_23, %c0_24] : memref<1x9x24x8xbf16, #tpu.memory_space<vmem>>, vector<1x1x12x8xbf16>
    %32 = vector.shape_cast %31 : vector<1x1x12x8xbf16> to vector<12x8xbf16>
    %cst_25 = arith.constant dense<0.000000e+00> : vector<32x8xf32>
    %33 = tpu.matmul %1, %28, %cst_25 {dimension_numbers = #tpu.dot_dimension_numbers<[1], [0], [0], [1], [0, 0, 1, 1], [], []>} : vector<32x24xbf16>, vector<24x8xbf16>, vector<32x8xf32> -> vector<32x8xf32>
    %cst_26 = arith.constant dense<0.000000e+00> : vector<32x8xf32>
    %34 = tpu.matmul %2, %32, %cst_26 {dimension_numbers = #tpu.dot_dimension_numbers<[1], [0], [0], [1], [0, 0, 1, 1], [], []>} : vector<32x12xbf16>, vector<12x8xbf16>, vector<32x8xf32> -> vector<32x8xf32>
    %35 = arith.addf %33, %34 : vector<32x8xf32>
    %36 = vector.broadcast %3 : vector<32x1xf32> to vector<32x8xf32>
    %37 = arith.mulf %35, %36 : vector<32x8xf32>
    %38 = vector.broadcast %4 : vector<32x1xf32> to vector<32x8xf32>
    %39 = arith.addf %37, %38 : vector<32x8xf32>
    %cst_27 = arith.constant 0.000000e+00 : f32
    %40 = vector.broadcast %cst_27 : f32 to vector<32x8xf32>
    %41 = arith.maximumf %39, %40 : vector<32x8xf32>
    %c0_28 = arith.constant 0 : index
    %c0_29 = arith.constant 0 : index
    %c8 = arith.constant 8 : index
    %42 = vector.load %arg6[%c0_28, %c0_29, %c8] : memref<1x32x64xf32, #tpu.memory_space<vmem>>, vector<1x32x8xf32>
    %43 = vector.shape_cast %42 : vector<1x32x8xf32> to vector<32x8xf32>
    %44 = vector.shape_cast %41 : vector<32x8xf32> to vector<1x32x8xf32>
    tpu.vector_store %arg6[%c0_28, %c0_29, %c8], %44 {strides = array<i32>} : memref<1x32x64xf32, #tpu.memory_space<vmem>>, vector<1x32x8xf32>,
    %c2_i32 = arith.constant 2 : i32
    %45 = arith.addi %0, %c2_i32 : i32
    %c0_30 = arith.constant 0 : index
    %46 = arith.index_cast %45 : i32 to index
    %c0_31 = arith.constant 0 : index
    %c0_32 = arith.constant 0 : index
    %47 = vector.load %arg2[%c0_30, %46, %c0_31, %c0_32] : memref<1x9x24x8xbf16, #tpu.memory_space<vmem>>, vector<1x1x24x8xbf16>
    %48 = vector.shape_cast %47 : vector<1x1x24x8xbf16> to vector<24x8xbf16>
    %c1_i32_33 = arith.constant 1 : i32
    %49 = arith.addi %45, %c1_i32_33 : i32
    %c0_34 = arith.constant 0 : index
    %50 = arith.index_cast %49 : i32 to index
    %c0_35 = arith.constant 0 : index
    %c0_36 = arith.constant 0 : index
    %51 = vector.load %arg2[%c0_34, %50, %c0_35, %c0_36] : memref<1x9x24x8xbf16, #tpu.memory_space<vmem>>, vector<1x1x12x8xbf16>
    %52 = vector.shape_cast %51 : vector<1x1x12x8xbf16> to vector<12x8xbf16>
    %cst_37 = arith.constant dense<0.000000e+00> : vector<32x8xf32>
    %53 = tpu.matmul %1, %48, %cst_37 {dimension_numbers = #tpu.dot_dimension_numbers<[1], [0], [0], [1], [0, 0, 1, 1], [], []>} : vector<32x24xbf16>, vector<24x8xbf16>, vector<32x8xf32> -> vector<32x8xf32>
    %cst_38 = arith.constant dense<0.000000e+00> : vector<32x8xf32>
    %54 = tpu.matmul %2, %52, %cst_38 {dimension_numbers = #tpu.dot_dimension_numbers<[1], [0], [0], [1], [0, 0, 1, 1], [], []>} : vector<32x12xbf16>, vector<12x8xbf16>, vector<32x8xf32> -> vector<32x8xf32>
    %55 = arith.addf %53, %54 : vector<32x8xf32>
    %56 = vector.broadcast %3 : vector<32x1xf32> to vector<32x8xf32>
    %57 = arith.mulf %55, %56 : vector<32x8xf32>
    %58 = vector.broadcast %4 : vector<32x1xf32> to vector<32x8xf32>
    %59 = arith.addf %57, %58 : vector<32x8xf32>
    %cst_39 = arith.constant 0.000000e+00 : f32
    %60 = vector.broadcast %cst_39 : f32 to vector<32x8xf32>
    %61 = arith.maximumf %59, %60 : vector<32x8xf32>
    %c0_40 = arith.constant 0 : index
    %c0_41 = arith.constant 0 : index
    %c16 = arith.constant 16 : index
    %62 = vector.load %arg6[%c0_40, %c0_41, %c16] : memref<1x32x64xf32, #tpu.memory_space<vmem>>, vector<1x32x8xf32>
    %63 = vector.shape_cast %62 : vector<1x32x8xf32> to vector<32x8xf32>
    %64 = vector.shape_cast %61 : vector<32x8xf32> to vector<1x32x8xf32>
    tpu.vector_store %arg6[%c0_40, %c0_41, %c16], %64 {strides = array<i32>} : memref<1x32x64xf32, #tpu.memory_space<vmem>>, vector<1x32x8xf32>,
    %c3_i32 = arith.constant 3 : i32
    %65 = arith.addi %0, %c3_i32 : i32
    %c0_42 = arith.constant 0 : index
    %66 = arith.index_cast %65 : i32 to index
    %c0_43 = arith.constant 0 : index
    %c0_44 = arith.constant 0 : index
    %67 = vector.load %arg2[%c0_42, %66, %c0_43, %c0_44] : memref<1x9x24x8xbf16, #tpu.memory_space<vmem>>, vector<1x1x24x8xbf16>
    %68 = vector.shape_cast %67 : vector<1x1x24x8xbf16> to vector<24x8xbf16>
    %c1_i32_45 = arith.constant 1 : i32
    %69 = arith.addi %65, %c1_i32_45 : i32
    %c0_46 = arith.constant 0 : index
    %70 = arith.index_cast %69 : i32 to index
    %c0_47 = arith.constant 0 : index
    %c0_48 = arith.constant 0 : index
    %71 = vector.load %arg2[%c0_46, %70, %c0_47, %c0_48] : memref<1x9x24x8xbf16, #tpu.memory_space<vmem>>, vector<1x1x12x8xbf16>
    %72 = vector.shape_cast %71 : vector<1x1x12x8xbf16> to vector<12x8xbf16>
    %cst_49 = arith.constant dense<0.000000e+00> : vector<32x8xf32>
    %73 = tpu.matmul %1, %68, %cst_49 {dimension_numbers = #tpu.dot_dimension_numbers<[1], [0], [0], [1], [0, 0, 1, 1], [], []>} : vector<32x24xbf16>, vector<24x8xbf16>, vector<32x8xf32> -> vector<32x8xf32>
    %cst_50 = arith.constant dense<0.000000e+00> : vector<32x8xf32>
    %74 = tpu.matmul %2, %72, %cst_50 {dimension_numbers = #tpu.dot_dimension_numbers<[1], [0], [0], [1], [0, 0, 1, 1], [], []>} : vector<32x12xbf16>, vector<12x8xbf16>, vector<32x8xf32> -> vector<32x8xf32>
    %75 = arith.addf %73, %74 : vector<32x8xf32>
    %76 = vector.broadcast %3 : vector<32x1xf32> to vector<32x8xf32>
    %77 = arith.mulf %75, %76 : vector<32x8xf32>
    %78 = vector.broadcast %4 : vector<32x1xf32> to vector<32x8xf32>
    %79 = arith.addf %77, %78 : vector<32x8xf32>
    %cst_51 = arith.constant 0.000000e+00 : f32
    %80 = vector.broadcast %cst_51 : f32 to vector<32x8xf32>
    %81 = arith.maximumf %79, %80 : vector<32x8xf32>
    %c0_52 = arith.constant 0 : index
    %c0_53 = arith.constant 0 : index
    %c24_54 = arith.constant 24 : index
    %82 = vector.load %arg6[%c0_52, %c0_53, %c24_54] : memref<1x32x64xf32, #tpu.memory_space<vmem>>, vector<1x32x8xf32>
    %83 = vector.shape_cast %82 : vector<1x32x8xf32> to vector<32x8xf32>
    %84 = vector.shape_cast %81 : vector<32x8xf32> to vector<1x32x8xf32>
    tpu.vector_store %arg6[%c0_52, %c0_53, %c24_54], %84 {strides = array<i32>} : memref<1x32x64xf32, #tpu.memory_space<vmem>>, vector<1x32x8xf32>,
    %c4_i32 = arith.constant 4 : i32
    %85 = arith.addi %0, %c4_i32 : i32
    %c0_55 = arith.constant 0 : index
    %86 = arith.index_cast %85 : i32 to index
    %c0_56 = arith.constant 0 : index
    %c0_57 = arith.constant 0 : index
    %87 = vector.load %arg2[%c0_55, %86, %c0_56, %c0_57] : memref<1x9x24x8xbf16, #tpu.memory_space<vmem>>, vector<1x1x24x8xbf16>
    %88 = vector.shape_cast %87 : vector<1x1x24x8xbf16> to vector<24x8xbf16>
    %c1_i32_58 = arith.constant 1 : i32
    %89 = arith.addi %85, %c1_i32_58 : i32
    %c0_59 = arith.constant 0 : index
    %90 = arith.index_cast %89 : i32 to index
    %c0_60 = arith.constant 0 : index
    %c0_61 = arith.constant 0 : index
    %91 = vector.load %arg2[%c0_59, %90, %c0_60, %c0_61] : memref<1x9x24x8xbf16, #tpu.memory_space<vmem>>, vector<1x1x12x8xbf16>
    %92 = vector.shape_cast %91 : vector<1x1x12x8xbf16> to vector<12x8xbf16>
    %cst_62 = arith.constant dense<0.000000e+00> : vector<32x8xf32>
    %93 = tpu.matmul %1, %88, %cst_62 {dimension_numbers = #tpu.dot_dimension_numbers<[1], [0], [0], [1], [0, 0, 1, 1], [], []>} : vector<32x24xbf16>, vector<24x8xbf16>, vector<32x8xf32> -> vector<32x8xf32>
    %cst_63 = arith.constant dense<0.000000e+00> : vector<32x8xf32>
    %94 = tpu.matmul %2, %92, %cst_63 {dimension_numbers = #tpu.dot_dimension_numbers<[1], [0], [0], [1], [0, 0, 1, 1], [], []>} : vector<32x12xbf16>, vector<12x8xbf16>, vector<32x8xf32> -> vector<32x8xf32>
    %95 = arith.addf %93, %94 : vector<32x8xf32>
    %96 = vector.broadcast %3 : vector<32x1xf32> to vector<32x8xf32>
    %97 = arith.mulf %95, %96 : vector<32x8xf32>
    %98 = vector.broadcast %4 : vector<32x1xf32> to vector<32x8xf32>
    %99 = arith.addf %97, %98 : vector<32x8xf32>
    %cst_64 = arith.constant 0.000000e+00 : f32
    %100 = vector.broadcast %cst_64 : f32 to vector<32x8xf32>
    %101 = arith.maximumf %99, %100 : vector<32x8xf32>
    %c0_65 = arith.constant 0 : index
    %c0_66 = arith.constant 0 : index
    %c32 = arith.constant 32 : index
    %102 = vector.load %arg6[%c0_65, %c0_66, %c32] : memref<1x32x64xf32, #tpu.memory_space<vmem>>, vector<1x32x8xf32>
    %103 = vector.shape_cast %102 : vector<1x32x8xf32> to vector<32x8xf32>
    %104 = vector.shape_cast %101 : vector<32x8xf32> to vector<1x32x8xf32>
    tpu.vector_store %arg6[%c0_65, %c0_66, %c32], %104 {strides = array<i32>} : memref<1x32x64xf32, #tpu.memory_space<vmem>>, vector<1x32x8xf32>,
    %c5_i32 = arith.constant 5 : i32
    %105 = arith.addi %0, %c5_i32 : i32
    %c0_67 = arith.constant 0 : index
    %106 = arith.index_cast %105 : i32 to index
    %c0_68 = arith.constant 0 : index
    %c0_69 = arith.constant 0 : index
    %107 = vector.load %arg2[%c0_67, %106, %c0_68, %c0_69] : memref<1x9x24x8xbf16, #tpu.memory_space<vmem>>, vector<1x1x24x8xbf16>
    %108 = vector.shape_cast %107 : vector<1x1x24x8xbf16> to vector<24x8xbf16>
    %c1_i32_70 = arith.constant 1 : i32
    %109 = arith.addi %105, %c1_i32_70 : i32
    %c0_71 = arith.constant 0 : index
    %110 = arith.index_cast %109 : i32 to index
    %c0_72 = arith.constant 0 : index
    %c0_73 = arith.constant 0 : index
    %111 = vector.load %arg2[%c0_71, %110, %c0_72, %c0_73] : memref<1x9x24x8xbf16, #tpu.memory_space<vmem>>, vector<1x1x12x8xbf16>
    %112 = vector.shape_cast %111 : vector<1x1x12x8xbf16> to vector<12x8xbf16>
    %cst_74 = arith.constant dense<0.000000e+00> : vector<32x8xf32>
    %113 = tpu.matmul %1, %108, %cst_74 {dimension_numbers = #tpu.dot_dimension_numbers<[1], [0], [0], [1], [0, 0, 1, 1], [], []>} : vector<32x24xbf16>, vector<24x8xbf16>, vector<32x8xf32> -> vector<32x8xf32>
    %cst_75 = arith.constant dense<0.000000e+00> : vector<32x8xf32>
    %114 = tpu.matmul %2, %112, %cst_75 {dimension_numbers = #tpu.dot_dimension_numbers<[1], [0], [0], [1], [0, 0, 1, 1], [], []>} : vector<32x12xbf16>, vector<12x8xbf16>, vector<32x8xf32> -> vector<32x8xf32>
    %115 = arith.addf %113, %114 : vector<32x8xf32>
    %116 = vector.broadcast %3 : vector<32x1xf32> to vector<32x8xf32>
    %117 = arith.mulf %115, %116 : vector<32x8xf32>
    %118 = vector.broadcast %4 : vector<32x1xf32> to vector<32x8xf32>
    %119 = arith.addf %117, %118 : vector<32x8xf32>
    %cst_76 = arith.constant 0.000000e+00 : f32
    %120 = vector.broadcast %cst_76 : f32 to vector<32x8xf32>
    %121 = arith.maximumf %119, %120 : vector<32x8xf32>
    %c0_77 = arith.constant 0 : index
    %c0_78 = arith.constant 0 : index
    %c40 = arith.constant 40 : index
    %122 = vector.load %arg6[%c0_77, %c0_78, %c40] : memref<1x32x64xf32, #tpu.memory_space<vmem>>, vector<1x32x8xf32>
    %123 = vector.shape_cast %122 : vector<1x32x8xf32> to vector<32x8xf32>
    %124 = vector.shape_cast %121 : vector<32x8xf32> to vector<1x32x8xf32>
    tpu.vector_store %arg6[%c0_77, %c0_78, %c40], %124 {strides = array<i32>} : memref<1x32x64xf32, #tpu.memory_space<vmem>>, vector<1x32x8xf32>,
    %c6_i32 = arith.constant 6 : i32
    %125 = arith.addi %0, %c6_i32 : i32
    %c0_79 = arith.constant 0 : index
    %126 = arith.index_cast %125 : i32 to index
    %c0_80 = arith.constant 0 : index
    %c0_81 = arith.constant 0 : index
    %127 = vector.load %arg2[%c0_79, %126, %c0_80, %c0_81] : memref<1x9x24x8xbf16, #tpu.memory_space<vmem>>, vector<1x1x24x8xbf16>
    %128 = vector.shape_cast %127 : vector<1x1x24x8xbf16> to vector<24x8xbf16>
    %c1_i32_82 = arith.constant 1 : i32
    %129 = arith.addi %125, %c1_i32_82 : i32
    %c0_83 = arith.constant 0 : index
    %130 = arith.index_cast %129 : i32 to index
    %c0_84 = arith.constant 0 : index
    %c0_85 = arith.constant 0 : index
    %131 = vector.load %arg2[%c0_83, %130, %c0_84, %c0_85] : memref<1x9x24x8xbf16, #tpu.memory_space<vmem>>, vector<1x1x12x8xbf16>
    %132 = vector.shape_cast %131 : vector<1x1x12x8xbf16> to vector<12x8xbf16>
    %cst_86 = arith.constant dense<0.000000e+00> : vector<32x8xf32>
    %133 = tpu.matmul %1, %128, %cst_86 {dimension_numbers = #tpu.dot_dimension_numbers<[1], [0], [0], [1], [0, 0, 1, 1], [], []>} : vector<32x24xbf16>, vector<24x8xbf16>, vector<32x8xf32> -> vector<32x8xf32>
    %cst_87 = arith.constant dense<0.000000e+00> : vector<32x8xf32>
    %134 = tpu.matmul %2, %132, %cst_87 {dimension_numbers = #tpu.dot_dimension_numbers<[1], [0], [0], [1], [0, 0, 1, 1], [], []>} : vector<32x12xbf16>, vector<12x8xbf16>, vector<32x8xf32> -> vector<32x8xf32>
    %135 = arith.addf %133, %134 : vector<32x8xf32>
    %136 = vector.broadcast %3 : vector<32x1xf32> to vector<32x8xf32>
    %137 = arith.mulf %135, %136 : vector<32x8xf32>
    %138 = vector.broadcast %4 : vector<32x1xf32> to vector<32x8xf32>
    %139 = arith.addf %137, %138 : vector<32x8xf32>
    %cst_88 = arith.constant 0.000000e+00 : f32
    %140 = vector.broadcast %cst_88 : f32 to vector<32x8xf32>
    %141 = arith.maximumf %139, %140 : vector<32x8xf32>
    %c0_89 = arith.constant 0 : index
    %c0_90 = arith.constant 0 : index
    %c48 = arith.constant 48 : index
    %142 = vector.load %arg6[%c0_89, %c0_90, %c48] : memref<1x32x64xf32, #tpu.memory_space<vmem>>, vector<1x32x8xf32>
    %143 = vector.shape_cast %142 : vector<1x32x8xf32> to vector<32x8xf32>
    %144 = vector.shape_cast %141 : vector<32x8xf32> to vector<1x32x8xf32>
    tpu.vector_store %arg6[%c0_89, %c0_90, %c48], %144 {strides = array<i32>} : memref<1x32x64xf32, #tpu.memory_space<vmem>>, vector<1x32x8xf32>,
    %c7_i32 = arith.constant 7 : i32
    %145 = arith.addi %0, %c7_i32 : i32
    %c0_91 = arith.constant 0 : index
    %146 = arith.index_cast %145 : i32 to index
    %c0_92 = arith.constant 0 : index
    %c0_93 = arith.constant 0 : index
    %147 = vector.load %arg2[%c0_91, %146, %c0_92, %c0_93] : memref<1x9x24x8xbf16, #tpu.memory_space<vmem>>, vector<1x1x24x8xbf16>
    %148 = vector.shape_cast %147 : vector<1x1x24x8xbf16> to vector<24x8xbf16>
    %c1_i32_94 = arith.constant 1 : i32
    %149 = arith.addi %145, %c1_i32_94 : i32
    %c0_95 = arith.constant 0 : index
    %150 = arith.index_cast %149 : i32 to index
    %c0_96 = arith.constant 0 : index
    %c0_97 = arith.constant 0 : index
    %151 = vector.load %arg2[%c0_95, %150, %c0_96, %c0_97] : memref<1x9x24x8xbf16, #tpu.memory_space<vmem>>, vector<1x1x12x8xbf16>
    %152 = vector.shape_cast %151 : vector<1x1x12x8xbf16> to vector<12x8xbf16>
    %cst_98 = arith.constant dense<0.000000e+00> : vector<32x8xf32>
    %153 = tpu.matmul %1, %148, %cst_98 {dimension_numbers = #tpu.dot_dimension_numbers<[1], [0], [0], [1], [0, 0, 1, 1], [], []>} : vector<32x24xbf16>, vector<24x8xbf16>, vector<32x8xf32> -> vector<32x8xf32>
    %cst_99 = arith.constant dense<0.000000e+00> : vector<32x8xf32>
    %154 = tpu.matmul %2, %152, %cst_99 {dimension_numbers = #tpu.dot_dimension_numbers<[1], [0], [0], [1], [0, 0, 1, 1], [], []>} : vector<32x12xbf16>, vector<12x8xbf16>, vector<32x8xf32> -> vector<32x8xf32>
    %155 = arith.addf %153, %154 : vector<32x8xf32>
    %156 = vector.broadcast %3 : vector<32x1xf32> to vector<32x8xf32>
    %157 = arith.mulf %155, %156 : vector<32x8xf32>
    %158 = vector.broadcast %4 : vector<32x1xf32> to vector<32x8xf32>
    %159 = arith.addf %157, %158 : vector<32x8xf32>
    %cst_100 = arith.constant 0.000000e+00 : f32
    %160 = vector.broadcast %cst_100 : f32 to vector<32x8xf32>
    %161 = arith.maximumf %159, %160 : vector<32x8xf32>
    %c0_101 = arith.constant 0 : index
    %c0_102 = arith.constant 0 : index
    %c56 = arith.constant 56 : index
    %162 = vector.load %arg6[%c0_101, %c0_102, %c56] : memref<1x32x64xf32, #tpu.memory_space<vmem>>, vector<1x32x8xf32>
    %163 = vector.shape_cast %162 : vector<1x32x8xf32> to vector<32x8xf32>
    %164 = vector.shape_cast %161 : vector<32x8xf32> to vector<1x32x8xf32>
    tpu.vector_store %arg6[%c0_101, %c0_102, %c56], %164 {strides = array<i32>} : memref<1x32x64xf32, #tpu.memory_space<vmem>>, vector<1x32x8xf32>,
    return
  }
  func.func @transform_0(%arg0: i32, %arg1: i32) -> (i32, i32, i32, i32) {
    %c0_i32 = arith.constant 0 : i32
    %c0_i32_0 = arith.constant 0 : i32
    %c0_i32_1 = arith.constant 0 : i32
    %c0_i32_2 = arith.constant 0 : i32
    return %arg0, %c0_i32, %c0_i32_0, %c0_i32_1 : i32, i32, i32, i32
  }
  func.func @transform_1(%arg0: i32, %arg1: i32) -> (i32, i32) {
    %c0_i32 = arith.constant 0 : i32
    %c0_i32_0 = arith.constant 0 : i32
    %c0_i32_1 = arith.constant 0 : i32
    return %c0_i32, %c0_i32_0 : i32, i32
  }
  func.func @transform_2(%arg0: i32, %arg1: i32) -> (i32, i32) {
    %c0_i32 = arith.constant 0 : i32
    %c0_i32_0 = arith.constant 0 : i32
    %c0_i32_1 = arith.constant 0 : i32
    return %c0_i32, %c0_i32_0 : i32, i32
  }
  func.func @transform_3(%arg0: i32, %arg1: i32) -> (i32, i32) {
    %c0_i32 = arith.constant 0 : i32
    %c0_i32_0 = arith.constant 0 : i32
    %c0_i32_1 = arith.constant 0 : i32
    return %c0_i32, %c0_i32_0 : i32, i32
  }
  func.func @transform_4(%arg0: i32, %arg1: i32) -> (i32, i32, i32) {
    %c0_i32 = arith.constant 0 : i32
    %c0_i32_0 = arith.constant 0 : i32
    return %arg0, %c0_i32, %arg1 : i32, i32, i32
  }
}

</mosaic_0001>

<llo_original>
// kernel: _lambda_.2
$region0: #{_lambda_.2}
  #allocation0 [shape = 'u32[]', space=smem, size = 0x4, offset = 0x4, fixed_abs, tag = 'smem constant byte address 0x4 - core index']
  #allocation1 [shape = 'u32[72,128]{1,0:T(1,128)}', space=vmem, size = 0x9000, scoped, tag = 'internal scratch']
  #allocation2 [shape = 'f32[32,64]{1,0:T(8,128)}', space=vmem, size = 0x4000, scoped, tag = 'scratch operand']
  %s0 = inlined_call_operand.vmem [shape: bf16[2,9,24,8], index: 0, kind: input, shape index: {}]
  %s1 = inlined_call_operand.vmem [shape: bf16[32,36], index: 1, kind: input, shape index: {}]
  %s2 = inlined_call_operand.vmem [shape: f32[2,1,32,1], index: 2, kind: output, shape index: {0}]
  %s3 = inlined_call_operand.vmem [shape: f32[2,1,32,1], index: 3, kind: output, shape index: {1}]
  %4 = xla_tuple %s2, %s3
  %s5 = sld [smem:[#allocation0]]
  $region49: #{_lambda_.2} parent=0
    _
  %s7 = ssub.s32 1, %s5
  %s8 = scalar_select 0, %s7, %s5
  loop: start=0, step=1, limit=4
  $region2: #{_lambda_.2} parent=0 // loop_pre_header
    _
  $region3: #{_lambda_.2} parent=0 // loop_header
    %s10 = sphi 0, %s14
    %p11 = scmp.ge.s32.totalorder %s10, 4
    %s17 = sphi 0, %s29
    %s18 = sphi 0, %s25
    %s19 = sphi 0, %s17
    %s20 = sphi 0, %s18
    %s21 = sphi 0, %s19
    %s22 = sphi 0, %s20
    %s32 = sphi 0, %s34
    %s35 = sphi 0, %s32
    %s36 = sphi 0, %s35
    %s52 = sphi 0, %s36
    %s56 = sphi 0, %s56
    %s58 = sphi 0, %s56
    %s59 = sphi 0, %s58
    %s73 = sphi 0, %s59
    %s81 = sphi 0, %s83
    %s84 = sphi 0, %s81
    %s85 = sphi 0, %s84
    %s101 = sphi 0, %s85
    %s109 = sphi 0, %s111
    %s112 = sphi 0, %s109
    %s113 = sphi 0, %s112
    %s129 = sphi 0, %s113
  $region4: #{_lambda_.2} parent=0 // loop_header_branch
    %13 = sbr.rel (%p11) target = $region8
  $region5: #{_lambda_.2} parent=0 // loop_body
    %s15 = ssub.s32 %s10, 1
    %s16 = ssub.s32 %s10, 2
    %s23 = sadd.s32 1, %s18
    %p24 = scmp.ge.s32.totalorder %s23, 1
    %s25 = scalar_select %p24, 0, %s23
    %s26 = sadd.s32 1, %s17
    %s27 = scalar_select %p24, %s26, %s17
    %p28 = scmp.ge.s32.totalorder %s27, 2
    %s29 = scalar_select %p28, 0, %s27
    %s30 = ssub.s32 %s17, %s29
    %p31 = scmp.eq.s32.totalorder %s30, 0
    %s33 = sadd.s32 %s32, 1
    %s34 = scalar_select %p31, %s32, %s33
    %p37 = pneg %p31
    %p38 = scmp.eq.s32.totalorder %s10, 1
    %p39 = por %p37, %p38
    %p40 = scmp.ne.s32.totalorder %s32, %s35
    %p41 = scmp.eq.s32.totalorder %s10, 0
    %p42 = por %p40, %p41
    %p43 = scmp.ne.s32.totalorder %s32, %s35
    %p44 = scmp.eq.s32.totalorder %s15, 1
    %p45 = por %p43, %p44
    %p46 = scmp.ne.s32.totalorder %s35, %s36
    %p47 = scmp.eq.s32.totalorder %s15, 0
    %p48 = por %p46, %p47
    %p49 = scmp.ne.s32.totalorder %s35, %s36
    %p50 = scmp.eq.s32.totalorder %s16, 1
    %p51 = por %p49, %p50
    %p53 = scmp.ne.s32.totalorder %s36, %s52
    %p54 = scmp.eq.s32.totalorder %s16, 0
    %p55 = por %p53, %p54
    %s57 = sadd.s32 %s56, 1
    %p60 = scmp.eq.s32.totalorder %s10, 1
    %p61 = scmp.ne.s32.totalorder %s56, %s58
    %p62 = scmp.eq.s32.totalorder %s10, 0
    %p63 = por %p61, %p62
    %p64 = scmp.ne.s32.totalorder %s56, %s58
    %p65 = scmp.eq.s32.totalorder %s15, 1
    %p66 = por %p64, %p65
    %p67 = scmp.ne.s32.totalorder %s58, %s59
    %p68 = scmp.eq.s32.totalorder %s15, 0
    %p69 = por %p67, %p68
    %p70 = scmp.ne.s32.totalorder %s58, %s59
    %p71 = scmp.eq.s32.totalorder %s16, 1
    %p72 = por %p70, %p71
    %p74 = scmp.ne.s32.totalorder %s59, %s73
    %p75 = scmp.eq.s32.totalorder %s16, 0
    %p76 = por %p74, %p75
    %s77 = ssub.s32 %s17, %s29
    %s78 = ssub.s32 %s18, %s25
    %s79 = sor.u32 %s77, %s78
    %p80 = scmp.eq.s32.totalorder %s79, 0
    %s82 = sadd.s32 %s81, 1
    %s83 = scalar_select %p80, %s81, %s82
    %p86 = pneg %p80
    %p87 = scmp.eq.s32.totalorder %s10, 1
    %p88 = por %p86, %p87
    %p89 = scmp.ne.s32.totalorder %s81, %s84
    %p90 = scmp.eq.s32.totalorder %s10, 0
    %p91 = por %p89, %p90
    %p92 = scmp.ne.s32.totalorder %s81, %s84
    %p93 = scmp.eq.s32.totalorder %s15, 1
    %p94 = por %p92, %p93
    %p95 = scmp.ne.s32.totalorder %s84, %s85
    %p96 = scmp.eq.s32.totalorder %s15, 0
    %p97 = por %p95, %p96
    %p98 = scmp.ne.s32.totalorder %s84, %s85
    %p99 = scmp.eq.s32.totalorder %s16, 1
    %p100 = por %p98, %p99
    %p102 = scmp.ne.s32.totalorder %s85, %s101
    %p103 = scmp.eq.s32.totalorder %s16, 0
    %p104 = por %p102, %p103
    %s105 = ssub.s32 %s17, %s29
    %s106 = ssub.s32 %s18, %s25
    %s107 = sor.u32 %s105, %s106
    %p108 = scmp.eq.s32.totalorder %s107, 0
    %s110 = sadd.s32 %s109, 1
    %s111 = scalar_select %p108, %s109, %s110
    %p114 = pneg %p108
    %p115 = scmp.eq.s32.totalorder %s10, 1
    %p116 = por %p114, %p115
    %p117 = scmp.ne.s32.totalorder %s109, %s112
    %p118 = scmp.eq.s32.totalorder %s10, 0
    %p119 = por %p117, %p118
    %p120 = scmp.ne.s32.totalorder %s109, %s112
    %p121 = scmp.eq.s32.totalorder %s15, 1
    %p122 = por %p120, %p121
    %p123 = scmp.ne.s32.totalorder %s112, %s113
    %p124 = scmp.eq.s32.totalorder %s15, 0
    %p125 = por %p123, %p124
    %p126 = scmp.ne.s32.totalorder %s112, %s113
    %p127 = scmp.eq.s32.totalorder %s16, 1
    %p128 = por %p126, %p127
    %p130 = scmp.ne.s32.totalorder %s113, %s129
    %p131 = scmp.eq.s32.totalorder %s16, 0
    %p132 = por %p130, %p131
    %p133 = scmp.le.s32.totalorder 1, %s10
    %p134 = scmp.lt.s32.totalorder %s10, 3
    %p135 = pnand %p133, %p134
    %p136 = pneg %p135
    // Predicated region
    $region9: #{_lambda_.2} parent=5 // pred_check
      _
    $region10: #{_lambda_.2} parent=5 // pred_check_branch
      %138 = sbr.rel (%p135) target = $region12
    $region11: #{_lambda_.2} parent=5 // pred_region
      %s139 = ssub.s32 %s10, 1
      // Predicated region
      $region13: #{_lambda_.2} parent=11 // pred_check
        %p140 = pneg %p69
      $region14: #{_lambda_.2} parent=11 // pred_check_branch
        %142 = sbr.rel (%p140) target = $region16
      $region15: #{_lambda_.2} parent=11 // pred_region
        _
      $region16: #{_lambda_.2} parent=11 // pred_fallthru
        _
    $region12: #{_lambda_.2} parent=5 // pred_fallthru
      _
    %p143 = scmp.lt.s32.totalorder %s10, 2
    // Predicated region
    $region17: #{_lambda_.2} parent=5 // pred_check
      %p144 = pneg %p143
    $region18: #{_lambda_.2} parent=5 // pred_check_branch
      %146 = sbr.rel (%p144) target = $region20
    $region19: #{_lambda_.2} parent=5 // pred_region
      // Predicated region
      $region21: #{_lambda_.2} parent=19 // pred_check
        %p147 = pneg %p42
      $region22: #{_lambda_.2} parent=19 // pred_check_branch
        %149 = sbr.rel (%p147) target = $region24
      $region23: #{_lambda_.2} parent=19 // pred_region
        %p150 = scmp.lt.s32.totalorder %s17, 1
        %s151 = scalar_select %p150, %s17, 1
        %s152 = smul.addr %s151, 27
        %s153 = smul.addr %s152, 4
        %s154 = scalar_lea.vmem %s0, %s153
      $region24: #{_lambda_.2} parent=19 // pred_fallthru
        _
    $region20: #{_lambda_.2} parent=5 // pred_fallthru
      _
    %p155 = scmp.le.s32.totalorder 1, %s10
    %p156 = scmp.lt.s32.totalorder %s10, 3
    %p157 = pnand %p155, %p156
    %p158 = pneg %p157
    // Predicated region
    $region25: #{_lambda_.2} parent=5 // pred_check
      _
    $region26: #{_lambda_.2} parent=5 // pred_check_branch
      %160 = sbr.rel (%p157) target = $region28
    $region27: #{_lambda_.2} parent=5 // pred_region
      %s161 = ssub.s32 %s10, 1
      %p162 = scmp.lt.s32.totalorder %s19, 1
      %s163 = scalar_select %p162, %s19, 1
      %s164 = smul.addr %s163, 27
      %s165 = smul.addr %s164, 4
      %s166 = scalar_lea.vmem %s0, %s165
      %p167 = pneg %p48
      %p168 = pneg %p45
      %p169 = pneg %p69
      %p170 = pneg %p66
      %p171 = pneg %p97
      %p172 = pneg %p94
      %p173 = scmp.lt.s32.totalorder %s19, 1
      %s174 = scalar_select %p173, %s19, 1
      %p175 = scmp.lt.s32.totalorder %s20, 0
      %s176 = scalar_select %p175, %s20, 0
      %s177 = smul.addr %s176, 4
      %s178 = smul.addr %s174, 4
      %s179 = sadd.s32 %s177, %s178
      %s180 = smul.addr %s179, 8
      %s181 = scalar_lea.vmem %s2, %s180
      %p182 = pneg %p125
      %p183 = pneg %p122
      %p184 = scmp.lt.s32.totalorder %s19, 1
      %s185 = scalar_select %p184, %s19, 1
      %p186 = scmp.lt.s32.totalorder %s20, 0
      %s187 = scalar_select %p186, %s20, 0
      %s188 = smul.addr %s187, 4
      %s189 = smul.addr %s185, 4
      %s190 = sadd.s32 %s188, %s189
      %s191 = smul.addr %s190, 8
      %s192 = scalar_lea.vmem %s3, %s191
      %p193 = scmp.lt.s32.totalorder %s19, 1
      %s194 = scalar_select %p193, %s19, 1
      %s195 = smul.addr %s194, 27
      %s196 = smul.addr %s195, 4
      %s197 = scalar_lea.vmem %s0, %s196
      %p198 = scmp.lt.s32.totalorder %s19, 1
      %s199 = scalar_select %p198, %s19, 1
      %p200 = scmp.lt.s32.totalorder %s20, 0
      %s201 = scalar_select %p200, %s20, 0
      %s202 = smul.addr %s201, 4
      %s203 = smul.addr %s199, 4
      %s204 = sadd.s32 %s202, %s203
      %s205 = smul.addr %s204, 8
      %s206 = scalar_lea.vmem %s2, %s205
      %p207 = scmp.lt.s32.totalorder %s19, 1
      %s208 = scalar_select %p207, %s19, 1
      %p209 = scmp.lt.s32.totalorder %s20, 0
      %s210 = scalar_select %p209, %s20, 0
      %s211 = smul.addr %s210, 4
      %s212 = smul.addr %s208, 4
      %s213 = sadd.s32 %s211, %s212
      %s214 = smul.addr %s213, 8
      %s215 = scalar_lea.vmem %s3, %s214
      %s217 = smul.u32 %s20, 8
      %v218 = vld [vmem:[%s1] sm:$0xf]
      %v219 = vld [vmem:[%s1 + $0x4] sm:$0xf]
      %v220 = vld [vmem:[%s1 + $0x8] sm:$0xf]
      %v221 = vld [vmem:[%s1 + $0xc] sm:$0xf]
      %s222 = smul.u32 %s217, 3
      %s223 = smul.addr %s222, 4
      %s224 = scalar_lea.vmem %s197, %s223
      %v225 = vld [vmem:[%s224] sm:$0xf]
      %v226 = vld [vmem:[%s224 + $0x4] sm:$0xf]
      %v227 = vld [vmem:[%s224 + $0x8] sm:$0xf]
      %s228 = sadd.s32 %s217, 1
      %s229 = smul.u32 %s228, 3
      %s230 = smul.addr %s229, 4
      %s231 = scalar_lea.vmem %s197, %s230
      %v232 = vld [vmem:[%s231] sm:$0xf]
      %v233 = vld [vmem:[%s231 + $0x4] sm:$0x3]
      %v238 = vunpack.c.l.b16 %v218
      %v239 = vunpack.c.l.b16 %v219
      %v240 = vunpack.c.l.b16 %v220
      %v241 = vunpack.c.l.b16 %v221
      %v242 = vpack.c.b16 %v239, %v238
      %v243 = vpack.c.b16 %v241, %v240
      %244 = vrot.lane.b32.xlu0 %v242, 104
      %v245 = vpop.permute.xlu0 %244
      %246 = vrot.lane.b32.xlu0 %v243, 104
      %v247 = vpop.permute.xlu0 %246
      %v250 = vunpack.c.l.b16 %v232
      %v251 = vunpack.c.l.b16 %v233
      %v252 = vpack.c.b16 %v251, %v250
      %vm253 = vcmask 97280
      %v255 = vsel %vm253, %v245, 0
      %v258 = vsel %vm253, %v247, 0
      %vm260 = vcmask 1045504
      %v262 = vsel %vm260, %v252, 0
      %264 = vmatpush.bf16.msra.mxu0 0
      %265 = vmatpush.bf16.msra.mxu0 0
      %266 = vmatpush.bf16.msra.mxu0 0
      %267 = vmatpush.bf16.msra.mxu0 0
      %268 = vmatpush.bf16.msra.mxu0 0
      %269 = vmatpush.bf16.msra.mxu0 0
      %270 = vmatpush.bf16.msra.mxu0 0
      %271 = vmatpush.bf16.msra.mxu0 %v262
      %272 = vmatmul.bf16.gmra.mxu0 %v255
      %v273 = vpop.f32.mrf.mxu0
      %v274 = vadd.f32 0.0, %v273
      %v275 = vpop.f32.mrf.mxu0
      %v276 = vadd.f32 0.0, %v275
      %277 = vmatmul.bf16.gmra.mxu0 %v258
      %v278 = vpop.f32.mrf.mxu0
      %v279 = vadd.f32 0.0, %v278
      %v280 = vpop.f32.mrf.mxu0
      %v281 = vadd.f32 0.0, %v280
      %282 = vdwg.mxu0
      %v286 = vunpack.c.l.b16 %v225
      %v287 = vunpack.c.l.b16 %v226
      %v288 = vunpack.c.l.b16 %v227
      %v289 = vpack.c.b16 %v287, %v286
      %v290 = vpack.c.b16 %v288, %v288
      %vm292 = vcmask 195584
      %v294 = vsel %vm292, %v242, 0
      %v297 = vsel %vm292, %v243, 0
      %vm299 = vcmask 1043456
      %v301 = vsel %vm299, %v290, 0
      %303 = vmatpush.bf16.msra.mxu0 0
      %304 = vmatpush.bf16.msra.mxu0 0
      %305 = vmatpush.bf16.msra.mxu0 0
      %306 = vmatpush.bf16.msra.mxu0 0
      %307 = vmatpush.bf16.msra.mxu0 0
      %308 = vmatpush.bf16.msra.mxu0 0
      %309 = vmatpush.bf16.msra.mxu0 %v301
      %310 = vmatpush.bf16.msra.mxu0 %v289
      %311 = vmatmul.bf16.gmra.mxu0 %v294
      %v312 = vpop.f32.mrf.mxu0
      %v313 = vadd.f32 %v274, %v312
      %v314 = vpop.f32.mrf.mxu0
      %v315 = vadd.f32 %v276, %v314
      %316 = vmatmul.bf16.gmra.mxu0 %v297
      %v317 = vpop.f32.mrf.mxu0
      %v318 = vadd.f32 %v279, %v317
      %v319 = vpop.f32.mrf.mxu0
      %v320 = vadd.f32 %v281, %v319
      %321 = vdwg.mxu0
      %vm322 = vcmask 64512
      %323 = vst.msk [vmem:[#allocation2] sm:$0xff] %vm322, %v313
      %324 = vst.msk [vmem:[#allocation2 + $0x8] sm:$0xff] %vm322, %v315
      %325 = vst.msk [vmem:[#allocation2 + $0x10] sm:$0xff] %vm322, %v318
      %326 = vst.msk [vmem:[#allocation2 + $0x18] sm:$0xff] %vm322, %v320
      %v327 = vld [vmem:[%s231] sm:$0xf]
      %v328 = vld [vmem:[%s231 + $0x4] sm:$0xf]
      %v329 = vld [vmem:[%s231 + $0x8] sm:$0xf]
      %s330 = sadd.s32 %s217, 2
      %s331 = smul.u32 %s330, 3
      %s332 = smul.addr %s331, 4
      %s333 = scalar_lea.vmem %s197, %s332
      %v334 = vld [vmem:[%s333] sm:$0xf]
      %v335 = vld [vmem:[%s333 + $0x4] sm:$0x3]
      %v338 = vunpack.c.l.b16 %v334
      %v339 = vunpack.c.l.b16 %v335
      %v340 = vpack.c.b16 %v339, %v338
      %v342 = vsel %vm260, %v340, 0
      %344 = vmatpush.bf16.msra.mxu0 0
      %345 = vmatpush.bf16.msra.mxu0 0
      %346 = vmatpush.bf16.msra.mxu0 0
      %347 = vmatpush.bf16.msra.mxu0 0
      %348 = vmatpush.bf16.msra.mxu0 0
      %349 = vmatpush.bf16.msra.mxu0 0
      %350 = vmatpush.bf16.msra.mxu0 0
      %351 = vmatpush.bf16.msra.mxu0 %v342
      %352 = vmatmul.bf16.gmra.mxu0 %v255
      %v353 = vpop.f32.mrf.mxu0
      %v354 = vadd.f32 0.0, %v353
      %v355 = vpop.f32.mrf.mxu0
      %v356 = vadd.f32 0.0, %v355
      %357 = vmatmul.bf16.gmra.mxu0 %v258
      %v358 = vpop.f32.mrf.mxu0
      %v359 = vadd.f32 0.0, %v358
      %v360 = vpop.f32.mrf.mxu0
      %v361 = vadd.f32 0.0, %v360
      %362 = vdwg.mxu0
      %v366 = vunpack.c.l.b16 %v327
      %v367 = vunpack.c.l.b16 %v328
      %v368 = vunpack.c.l.b16 %v329
      %v369 = vpack.c.b16 %v367, %v366
      %v370 = vpack.c.b16 %v368, %v368
      %v373 = vsel %vm299, %v370, 0
      %375 = vmatpush.bf16.msra.mxu0 0
      %376 = vmatpush.bf16.msra.mxu0 0
      %377 = vmatpush.bf16.msra.mxu0 0
      %378 = vmatpush.bf16.msra.mxu0 0
      %379 = vmatpush.bf16.msra.mxu0 0
      %380 = vmatpush.bf16.msra.mxu0 0
      %381 = vmatpush.bf16.msra.mxu0 %v373
      %382 = vmatpush.bf16.msra.mxu0 %v369
      %383 = vmatmul.bf16.gmra.mxu0 %v294
      %v384 = vpop.f32.mrf.mxu0
      %v385 = vadd.f32 %v354, %v384
      %v386 = vpop.f32.mrf.mxu0
      %v387 = vadd.f32 %v356, %v386
      %388 = vmatmul.bf16.gmra.mxu0 %v297
      %v389 = vpop.f32.mrf.mxu0
      %v390 = vadd.f32 %v359, %v389
      %v391 = vpop.f32.mrf.mxu0
      %v392 = vadd.f32 %v361, %v391
      %393 = vdwg.mxu0
      %398 = vrot.lane.b32.xlu0 %v385, 8
      %v399 = vpop.permute.xlu0 %398
      %400 = vrot.lane.b32.xlu0 %v387, 8
      %v401 = vpop.permute.xlu0 %400
      %402 = vrot.lane.b32.xlu0 %v390, 8
      %v403 = vpop.permute.xlu0 %402
      %404 = vrot.lane.b32.xlu0 %v392, 8
      %v405 = vpop.permute.xlu0 %404
      %vm410 = vcmask 130112
      %411 = vst.msk [vmem:[#allocation2] sm:$0xff] %vm410, %v399
      %412 = vst.msk [vmem:[#allocation2 + $0x8] sm:$0xff] %vm410, %v401
      %413 = vst.msk [vmem:[#allocation2 + $0x10] sm:$0xff] %vm410, %v403
      %414 = vst.msk [vmem:[#allocation2 + $0x18] sm:$0xff] %vm410, %v405
      %v415 = vld [vmem:[%s333] sm:$0xf]
      %v416 = vld [vmem:[%s333 + $0x4] sm:$0xf]
      %v417 = vld [vmem:[%s333 + $0x8] sm:$0xf]
      %s418 = sadd.s32 %s217, 3
      %s419 = smul.u32 %s418, 3
      %s420 = smul.addr %s419, 4
      %s421 = scalar_lea.vmem %s197, %s420
      %v422 = vld [vmem:[%s421] sm:$0xf]
      %v423 = vld [vmem:[%s421 + $0x4] sm:$0x3]
      %v426 = vunpack.c.l.b16 %v422
      %v427 = vunpack.c.l.b16 %v423
      %v428 = vpack.c.b16 %v427, %v426
      %v430 = vsel %vm260, %v428, 0
      %432 = vmatpush.bf16.msra.mxu0 0
      %433 = vmatpush.bf16.msra.mxu0 0
      %434 = vmatpush.bf16.msra.mxu0 0
      %435 = vmatpush.bf16.msra.mxu0 0
      %436 = vmatpush.bf16.msra.mxu0 0
      %437 = vmatpush.bf16.msra.mxu0 0
      %438 = vmatpush.bf16.msra.mxu0 0
      %439 = vmatpush.bf16.msra.mxu0 %v430
      %440 = vmatmul.bf16.gmra.mxu0 %v255
      %v441 = vpop.f32.mrf.mxu0
      %v442 = vadd.f32 0.0, %v441
      %v443 = vpop.f32.mrf.mxu0
      %v444 = vadd.f32 0.0, %v443
      %445 = vmatmul.bf16.gmra.mxu0 %v258
      %v446 = vpop.f32.mrf.mxu0
      %v447 = vadd.f32 0.0, %v446
      %v448 = vpop.f32.mrf.mxu0
      %v449 = vadd.f32 0.0, %v448
      %450 = vdwg.mxu0
      %v454 = vunpack.c.l.b16 %v415
      %v455 = vunpack.c.l.b16 %v416
      %v456 = vunpack.c.l.b16 %v417
      %v457 = vpack.c.b16 %v455, %v454
      %v458 = vpack.c.b16 %v456, %v456
      %v461 = vsel %vm299, %v458, 0
      %463 = vmatpush.bf16.msra.mxu0 0
      %464 = vmatpush.bf16.msra.mxu0 0
      %465 = vmatpush.bf16.msra.mxu0 0
      %466 = vmatpush.bf16.msra.mxu0 0
      %467 = vmatpush.bf16.msra.mxu0 0
      %468 = vmatpush.bf16.msra.mxu0 0
      %469 = vmatpush.bf16.msra.mxu0 %v461
      %470 = vmatpush.bf16.msra.mxu0 %v457
      %471 = vmatmul.bf16.gmra.mxu0 %v294
      %v472 = vpop.f32.mrf.mxu0
      %v473 = vadd.f32 %v442, %v472
      %v474 = vpop.f32.mrf.mxu0
      %v475 = vadd.f32 %v444, %v474
      %476 = vmatmul.bf16.gmra.mxu0 %v297
      %v477 = vpop.f32.mrf.mxu0
      %v478 = vadd.f32 %v447, %v477
      %v479 = vpop.f32.mrf.mxu0
      %v480 = vadd.f32 %v449, %v479
      %481 = vdwg.mxu0
      %486 = vrot.lane.b32.xlu0 %v473, 16
      %v487 = vpop.permute.xlu0 %486
      %488 = vrot.lane.b32.xlu0 %v475, 16
      %v489 = vpop.permute.xlu0 %488
      %490 = vrot.lane.b32.xlu0 %v478, 16
      %v491 = vpop.permute.xlu0 %490
      %492 = vrot.lane.b32.xlu0 %v480, 16
      %v493 = vpop.permute.xlu0 %492
      %vm498 = vcmask 195712
      %499 = vst.msk [vmem:[#allocation2] sm:$0xff] %vm498, %v487
      %500 = vst.msk [vmem:[#allocation2 + $0x8] sm:$0xff] %vm498, %v489
      %501 = vst.msk [vmem:[#allocation2 + $0x10] sm:$0xff] %vm498, %v491
      %502 = vst.msk [vmem:[#allocation2 + $0x18] sm:$0xff] %vm498, %v493
      %v503 = vld [vmem:[%s421] sm:$0xf]
      %v504 = vld [vmem:[%s421 + $0x4] sm:$0xf]
      %v505 = vld [vmem:[%s421 + $0x8] sm:$0xf]
      %s506 = sadd.s32 %s217, 4
      %s507 = smul.u32 %s506, 3
      %s508 = smul.addr %s507, 4
      %s509 = scalar_lea.vmem %s197, %s508
      %v510 = vld [vmem:[%s509] sm:$0xf]
      %v511 = vld [vmem:[%s509 + $0x4] sm:$0x3]
      %v514 = vunpack.c.l.b16 %v510
      %v515 = vunpack.c.l.b16 %v511
      %v516 = vpack.c.b16 %v515, %v514
      %v518 = vsel %vm260, %v516, 0
      %520 = vmatpush.bf16.msra.mxu0 0
      %521 = vmatpush.bf16.msra.mxu0 0
      %522 = vmatpush.bf16.msra.mxu0 0
      %523 = vmatpush.bf16.msra.mxu0 0
      %524 = vmatpush.bf16.msra.mxu0 0
      %525 = vmatpush.bf16.msra.mxu0 0
      %526 = vmatpush.bf16.msra.mxu0 0
      %527 = vmatpush.bf16.msra.mxu0 %v518
      %528 = vmatmul.bf16.gmra.mxu0 %v255
      %v529 = vpop.f32.mrf.mxu0
      %v530 = vadd.f32 0.0, %v529
      %v531 = vpop.f32.mrf.mxu0
      %v532 = vadd.f32 0.0, %v531
      %533 = vmatmul.bf16.gmra.mxu0 %v258
      %v534 = vpop.f32.mrf.mxu0
      %v535 = vadd.f32 0.0, %v534
      %v536 = vpop.f32.mrf.mxu0
      %v537 = vadd.f32 0.0, %v536
      %538 = vdwg.mxu0
      %v542 = vunpack.c.l.b16 %v503
      %v543 = vunpack.c.l.b16 %v504
      %v544 = vunpack.c.l.b16 %v505
      %v545 = vpack.c.b16 %v543, %v542
      %v546 = vpack.c.b16 %v544, %v544
      %v549 = vsel %vm299, %v546, 0
      %551 = vmatpush.bf16.msra.mxu0 0
      %552 = vmatpush.bf16.msra.mxu0 0
      %553 = vmatpush.bf16.msra.mxu0 0
      %554 = vmatpush.bf16.msra.mxu0 0
      %555 = vmatpush.bf16.msra.mxu0 0
      %556 = vmatpush.bf16.msra.mxu0 0
      %557 = vmatpush.bf16.msra.mxu0 %v549
      %558 = vmatpush.bf16.msra.mxu0 %v545
      %559 = vmatmul.bf16.gmra.mxu0 %v294
      %v560 = vpop.f32.mrf.mxu0
      %v561 = vadd.f32 %v530, %v560
      %v562 = vpop.f32.mrf.mxu0
      %v563 = vadd.f32 %v532, %v562
      %564 = vmatmul.bf16.gmra.mxu0 %v297
      %v565 = vpop.f32.mrf.mxu0
      %v566 = vadd.f32 %v535, %v565
      %v567 = vpop.f32.mrf.mxu0
      %v568 = vadd.f32 %v537, %v567
      %569 = vdwg.mxu0
      %574 = vrot.lane.b32.xlu0 %v561, 24
      %v575 = vpop.permute.xlu0 %574
      %576 = vrot.lane.b32.xlu0 %v563, 24
      %v577 = vpop.permute.xlu0 %576
      %578 = vrot.lane.b32.xlu0 %v566, 24
      %v579 = vpop.permute.xlu0 %578
      %580 = vrot.lane.b32.xlu0 %v568, 24
      %v581 = vpop.permute.xlu0 %580
      %vm586 = vcmask 261312
      %587 = vst.msk [vmem:[#allocation2] sm:$0xff] %vm586, %v575
      %588 = vst.msk [vmem:[#allocation2 + $0x8] sm:$0xff] %vm586, %v577
      %589 = vst.msk [vmem:[#allocation2 + $0x10] sm:$0xff] %vm586, %v579
      %590 = vst.msk [vmem:[#allocation2 + $0x18] sm:$0xff] %vm586, %v581
      %v591 = vld [vmem:[%s509] sm:$0xf]
      %v592 = vld [vmem:[%s509 + $0x4] sm:$0xf]
      %v593 = vld [vmem:[%s509 + $0x8] sm:$0xf]
      %s594 = sadd.s32 %s217, 5
      %s595 = smul.u32 %s594, 3
      %s596 = smul.addr %s595, 4
      %s597 = scalar_lea.vmem %s197, %s596
      %v598 = vld [vmem:[%s597] sm:$0xf]
      %v599 = vld [vmem:[%s597 + $0x4] sm:$0x3]
      %v602 = vunpack.c.l.b16 %v598
      %v603 = vunpack.c.l.b16 %v599
      %v604 = vpack.c.b16 %v603, %v602
      %v606 = vsel %vm260, %v604, 0
      %608 = vmatpush.bf16.msra.mxu0 0
      %609 = vmatpush.bf16.msra.mxu0 0
      %610 = vmatpush.bf16.msra.mxu0 0
      %611 = vmatpush.bf16.msra.mxu0 0
      %612 = vmatpush.bf16.msra.mxu0 0
      %613 = vmatpush.bf16.msra.mxu0 0
      %614 = vmatpush.bf16.msra.mxu0 0
      %615 = vmatpush.bf16.msra.mxu0 %v606
      %616 = vmatmul.bf16.gmra.mxu0 %v255
      %v617 = vpop.f32.mrf.mxu0
      %v618 = vadd.f32 0.0, %v617
      %v619 = vpop.f32.mrf.mxu0
      %v620 = vadd.f32 0.0, %v619
      %621 = vmatmul.bf16.gmra.mxu0 %v258
      %v622 = vpop.f32.mrf.mxu0
      %v623 = vadd.f32 0.0, %v622
      %v624 = vpop.f32.mrf.mxu0
      %v625 = vadd.f32 0.0, %v624
      %626 = vdwg.mxu0
      %v630 = vunpack.c.l.b16 %v591
      %v631 = vunpack.c.l.b16 %v592
      %v632 = vunpack.c.l.b16 %v593
      %v633 = vpack.c.b16 %v631, %v630
      %v634 = vpack.c.b16 %v632, %v632
      %v637 = vsel %vm299, %v634, 0
      %639 = vmatpush.bf16.msra.mxu0 0
      %640 = vmatpush.bf16.msra.mxu0 0
      %641 = vmatpush.bf16.msra.mxu0 0
      %642 = vmatpush.bf16.msra.mxu0 0
      %643 = vmatpush.bf16.msra.mxu0 0
      %644 = vmatpush.bf16.msra.mxu0 0
      %645 = vmatpush.bf16.msra.mxu0 %v637
      %646 = vmatpush.bf16.msra.mxu0 %v633
      %647 = vmatmul.bf16.gmra.mxu0 %v294
      %v648 = vpop.f32.mrf.mxu0
      %v649 = vadd.f32 %v618, %v648
      %v650 = vpop.f32.mrf.mxu0
      %v651 = vadd.f32 %v620, %v650
      %652 = vmatmul.bf16.gmra.mxu0 %v297
      %v653 = vpop.f32.mrf.mxu0
      %v654 = vadd.f32 %v623, %v653
      %v655 = vpop.f32.mrf.mxu0
      %v656 = vadd.f32 %v625, %v655
      %657 = vdwg.mxu0
      %662 = vrot.lane.b32.xlu0 %v649, 32
      %v663 = vpop.permute.xlu0 %662
      %664 = vrot.lane.b32.xlu0 %v651, 32
      %v665 = vpop.permute.xlu0 %664
      %666 = vrot.lane.b32.xlu0 %v654, 32
      %v667 = vpop.permute.xlu0 %666
      %668 = vrot.lane.b32.xlu0 %v656, 32
      %v669 = vpop.permute.xlu0 %668
      %vm674 = vcmask 326912
      %675 = vst.msk [vmem:[#allocation2] sm:$0xff] %vm674, %v663
      %676 = vst.msk [vmem:[#allocation2 + $0x8] sm:$0xff] %vm674, %v665
      %677 = vst.msk [vmem:[#allocation2 + $0x10] sm:$0xff] %vm674, %v667
      %678 = vst.msk [vmem:[#allocation2 + $0x18] sm:$0xff] %vm674, %v669
      %v679 = vld [vmem:[%s597] sm:$0xf]
      %v680 = vld [vmem:[%s597 + $0x4] sm:$0xf]
      %v681 = vld [vmem:[%s597 + $0x8] sm:$0xf]
      %s682 = sadd.s32 %s217, 6
      %s683 = smul.u32 %s682, 3
      %s684 = smul.addr %s683, 4
      %s685 = scalar_lea.vmem %s197, %s684
      %v686 = vld [vmem:[%s685] sm:$0xf]
      %v687 = vld [vmem:[%s685 + $0x4] sm:$0x3]
      %v690 = vunpack.c.l.b16 %v686
      %v691 = vunpack.c.l.b16 %v687
      %v692 = vpack.c.b16 %v691, %v690
      %v694 = vsel %vm260, %v692, 0
      %696 = vmatpush.bf16.msra.mxu0 0
      %697 = vmatpush.bf16.msra.mxu0 0
      %698 = vmatpush.bf16.msra.mxu0 0
      %699 = vmatpush.bf16.msra.mxu0 0
      %700 = vmatpush.bf16.msra.mxu0 0
      %701 = vmatpush.bf16.msra.mxu0 0
      %702 = vmatpush.bf16.msra.mxu0 0
      %703 = vmatpush.bf16.msra.mxu0 %v694
      %704 = vmatmul.bf16.gmra.mxu0 %v255
      %v705 = vpop.f32.mrf.mxu0
      %v706 = vadd.f32 0.0, %v705
      %v707 = vpop.f32.mrf.mxu0
      %v708 = vadd.f32 0.0, %v707
      %709 = vmatmul.bf16.gmra.mxu0 %v258
      %v710 = vpop.f32.mrf.mxu0
      %v711 = vadd.f32 0.0, %v710
      %v712 = vpop.f32.mrf.mxu0
      %v713 = vadd.f32 0.0, %v712
      %714 = vdwg.mxu0
      %v718 = vunpack.c.l.b16 %v679
      %v719 = vunpack.c.l.b16 %v680
      %v720 = vunpack.c.l.b16 %v681
      %v721 = vpack.c.b16 %v719, %v718
      %v722 = vpack.c.b16 %v720, %v720
      %v725 = vsel %vm299, %v722, 0
      %727 = vmatpush.bf16.msra.mxu0 0
      %728 = vmatpush.bf16.msra.mxu0 0
      %729 = vmatpush.bf16.msra.mxu0 0
      %730 = vmatpush.bf16.msra.mxu0 0
      %731 = vmatpush.bf16.msra.mxu0 0
      %732 = vmatpush.bf16.msra.mxu0 0
      %733 = vmatpush.bf16.msra.mxu0 %v725
      %734 = vmatpush.bf16.msra.mxu0 %v721
      %735 = vmatmul.bf16.gmra.mxu0 %v294
      %v736 = vpop.f32.mrf.mxu0
      %v737 = vadd.f32 %v706, %v736
      %v738 = vpop.f32.mrf.mxu0
      %v739 = vadd.f32 %v708, %v738
      %740 = vmatmul.bf16.gmra.mxu0 %v297
      %v741 = vpop.f32.mrf.mxu0
      %v742 = vadd.f32 %v711, %v741
      %v743 = vpop.f32.mrf.mxu0
      %v744 = vadd.f32 %v713, %v743
      %745 = vdwg.mxu0
      %750 = vrot.lane.b32.xlu0 %v737, 40
      %v751 = vpop.permute.xlu0 %750
      %752 = vrot.lane.b32.xlu0 %v739, 40
      %v753 = vpop.permute.xlu0 %752
      %754 = vrot.lane.b32.xlu0 %v742, 40
      %v755 = vpop.permute.xlu0 %754
      %756 = vrot.lane.b32.xlu0 %v744, 40
      %v757 = vpop.permute.xlu0 %756
      %vm762 = vcmask 392512
      %763 = vst.msk [vmem:[#allocation2] sm:$0xff] %vm762, %v751
      %764 = vst.msk [vmem:[#allocation2 + $0x8] sm:$0xff] %vm762, %v753
      %765 = vst.msk [vmem:[#allocation2 + $0x10] sm:$0xff] %vm762, %v755
      %766 = vst.msk [vmem:[#allocation2 + $0x18] sm:$0xff] %vm762, %v757
      %v767 = vld [vmem:[%s685] sm:$0xf]
      %v768 = vld [vmem:[%s685 + $0x4] sm:$0xf]
      %v769 = vld [vmem:[%s685 + $0x8] sm:$0xf]
      %s770 = sadd.s32 %s217, 7
      %s771 = smul.u32 %s770, 3
      %s772 = smul.addr %s771, 4
      %s773 = scalar_lea.vmem %s197, %s772
      %v774 = vld [vmem:[%s773] sm:$0xf]
      %v775 = vld [vmem:[%s773 + $0x4] sm:$0x3]
      %v778 = vunpack.c.l.b16 %v774
      %v779 = vunpack.c.l.b16 %v775
      %v780 = vpack.c.b16 %v779, %v778
      %v782 = vsel %vm260, %v780, 0
      %784 = vmatpush.bf16.msra.mxu0 0
      %785 = vmatpush.bf16.msra.mxu0 0
      %786 = vmatpush.bf16.msra.mxu0 0
      %787 = vmatpush.bf16.msra.mxu0 0
      %788 = vmatpush.bf16.msra.mxu0 0
      %789 = vmatpush.bf16.msra.mxu0 0
      %790 = vmatpush.bf16.msra.mxu0 0
      %791 = vmatpush.bf16.msra.mxu0 %v782
      %792 = vmatmul.bf16.gmra.mxu0 %v255
      %v793 = vpop.f32.mrf.mxu0
      %v794 = vadd.f32 0.0, %v793
      %v795 = vpop.f32.mrf.mxu0
      %v796 = vadd.f32 0.0, %v795
      %797 = vmatmul.bf16.gmra.mxu0 %v258
      %v798 = vpop.f32.mrf.mxu0
      %v799 = vadd.f32 0.0, %v798
      %v800 = vpop.f32.mrf.mxu0
      %v801 = vadd.f32 0.0, %v800
      %802 = vdwg.mxu0
      %v806 = vunpack.c.l.b16 %v767
      %v807 = vunpack.c.l.b16 %v768
      %v808 = vunpack.c.l.b16 %v769
      %v809 = vpack.c.b16 %v807, %v806
      %v810 = vpack.c.b16 %v808, %v808
      %v813 = vsel %vm299, %v810, 0
      %815 = vmatpush.bf16.msra.mxu0 0
      %816 = vmatpush.bf16.msra.mxu0 0
      %817 = vmatpush.bf16.msra.mxu0 0
      %818 = vmatpush.bf16.msra.mxu0 0
      %819 = vmatpush.bf16.msra.mxu0 0
      %820 = vmatpush.bf16.msra.mxu0 0
      %821 = vmatpush.bf16.msra.mxu0 %v813
      %822 = vmatpush.bf16.msra.mxu0 %v809
      %823 = vmatmul.bf16.gmra.mxu0 %v294
      %v824 = vpop.f32.mrf.mxu0
      %v825 = vadd.f32 %v794, %v824
      %v826 = vpop.f32.mrf.mxu0
      %v827 = vadd.f32 %v796, %v826
      %828 = vmatmul.bf16.gmra.mxu0 %v297
      %v829 = vpop.f32.mrf.mxu0
      %v830 = vadd.f32 %v799, %v829
      %v831 = vpop.f32.mrf.mxu0
      %v832 = vadd.f32 %v801, %v831
      %833 = vdwg.mxu0
      %838 = vrot.lane.b32.xlu0 %v825, 48
      %v839 = vpop.permute.xlu0 %838
      %840 = vrot.lane.b32.xlu0 %v827, 48
      %v841 = vpop.permute.xlu0 %840
      %842 = vrot.lane.b32.xlu0 %v830, 48
      %v843 = vpop.permute.xlu0 %842
      %844 = vrot.lane.b32.xlu0 %v832, 48
      %v845 = vpop.permute.xlu0 %844
      %vm850 = vcmask 458112
      %851 = vst.msk [vmem:[#allocation2] sm:$0xff] %vm850, %v839
      %852 = vst.msk [vmem:[#allocation2 + $0x8] sm:$0xff] %vm850, %v841
      %853 = vst.msk [vmem:[#allocation2 + $0x10] sm:$0xff] %vm850, %v843
      %854 = vst.msk [vmem:[#allocation2 + $0x18] sm:$0xff] %vm850, %v845
      %v855 = vld [vmem:[%s773] sm:$0xf]
      %v856 = vld [vmem:[%s773 + $0x4] sm:$0xf]
      %v857 = vld [vmem:[%s773 + $0x8] sm:$0xf]
      %s858 = sadd.s32 %s217, 8
      %s859 = smul.u32 %s858, 3
      %s860 = smul.addr %s859, 4
      %s861 = scalar_lea.vmem %s197, %s860
      %v862 = vld [vmem:[%s861] sm:$0xf]
      %v863 = vld [vmem:[%s861 + $0x4] sm:$0x3]
      %v866 = vunpack.c.l.b16 %v862
      %v867 = vunpack.c.l.b16 %v863
      %v868 = vpack.c.b16 %v867, %v866
      %v870 = vsel %vm260, %v868, 0
      %872 = vmatpush.bf16.msra.mxu0 0
      %873 = vmatpush.bf16.msra.mxu0 0
      %874 = vmatpush.bf16.msra.mxu0 0
      %875 = vmatpush.bf16.msra.mxu0 0
      %876 = vmatpush.bf16.msra.mxu0 0
      %877 = vmatpush.bf16.msra.mxu0 0
      %878 = vmatpush.bf16.msra.mxu0 0
      %879 = vmatpush.bf16.msra.mxu0 %v870
      %880 = vmatmul.bf16.gmra.mxu0 %v255
      %v881 = vpop.f32.mrf.mxu0
      %v882 = vadd.f32 0.0, %v881
      %v883 = vpop.f32.mrf.mxu0
      %v884 = vadd.f32 0.0, %v883
      %885 = vmatmul.bf16.gmra.mxu0 %v258
      %v886 = vpop.f32.mrf.mxu0
      %v887 = vadd.f32 0.0, %v886
      %v888 = vpop.f32.mrf.mxu0
      %v889 = vadd.f32 0.0, %v888
      %890 = vdwg.mxu0
      %v894 = vunpack.c.l.b16 %v855
      %v895 = vunpack.c.l.b16 %v856
      %v896 = vunpack.c.l.b16 %v857
      %v897 = vpack.c.b16 %v895, %v894
      %v898 = vpack.c.b16 %v896, %v896
      %v901 = vsel %vm299, %v898, 0
      %903 = vmatpush.bf16.msra.mxu0 0
      %904 = vmatpush.bf16.msra.mxu0 0
      %905 = vmatpush.bf16.msra.mxu0 0
      %906 = vmatpush.bf16.msra.mxu0 0
      %907 = vmatpush.bf16.msra.mxu0 0
      %908 = vmatpush.bf16.msra.mxu0 0
      %909 = vmatpush.bf16.msra.mxu0 %v901
      %910 = vmatpush.bf16.msra.mxu0 %v897
      %911 = vmatmul.bf16.gmra.mxu0 %v294
      %v912 = vpop.f32.mrf.mxu0
      %v913 = vadd.f32 %v882, %v912
      %v914 = vpop.f32.mrf.mxu0
      %v915 = vadd.f32 %v884, %v914
      %916 = vmatmul.bf16.gmra.mxu0 %v297
      %v917 = vpop.f32.mrf.mxu0
      %v918 = vadd.f32 %v887, %v917
      %v919 = vpop.f32.mrf.mxu0
      %v920 = vadd.f32 %v889, %v919
      %921 = vdwg.mxu0
      %926 = vrot.lane.b32.xlu0 %v913, 56
      %v927 = vpop.permute.xlu0 %926
      %928 = vrot.lane.b32.xlu0 %v915, 56
      %v929 = vpop.permute.xlu0 %928
      %930 = vrot.lane.b32.xlu0 %v918, 56
      %v931 = vpop.permute.xlu0 %930
      %932 = vrot.lane.b32.xlu0 %v920, 56
      %v933 = vpop.permute.xlu0 %932
      %vm938 = vcmask 523712
      %939 = vst.msk [vmem:[#allocation2] sm:$0xff] %vm938, %v927
      %940 = vst.msk [vmem:[#allocation2 + $0x8] sm:$0xff] %vm938, %v929
      %941 = vst.msk [vmem:[#allocation2 + $0x10] sm:$0xff] %vm938, %v931
      %942 = vst.msk [vmem:[#allocation2 + $0x18] sm:$0xff] %vm938, %v933
      %v943 = vld [vmem:[#allocation2] sm:$0xff]
      %v944 = vld [vmem:[#allocation2 + $0x8] sm:$0xff]
      %v945 = vld [vmem:[#allocation2 + $0x10] sm:$0xff]
      %v946 = vld [vmem:[#allocation2 + $0x18] sm:$0xff]
      %vm947 = vcmask 523264
      %v948 = vsel %vm947, %v943, 0.0
      %949 = vadd.xlane.f32.xlu0 %v948
      %v950 = vpop.xlane.xlu0 %949
      %v951 = vsel %vm947, %v944, 0.0
      %952 = vadd.xlane.f32.xlu0 %v951
      %v953 = vpop.xlane.xlu0 %952
      %v954 = vsel %vm947, %v945, 0.0
      %955 = vadd.xlane.f32.xlu0 %v954
      %v956 = vpop.xlane.xlu0 %955
      %v957 = vsel %vm947, %v946, 0.0
      %958 = vadd.xlane.f32.xlu0 %v957
      %v959 = vpop.xlane.xlu0 %958
      %v960 = vmul.f32 %v950, 0.015625
      %v961 = vmul.f32 %v953, 0.015625
      %v962 = vmul.f32 %v956, 0.015625
      %v963 = vmul.f32 %v959, 0.015625
      %v964 = vsub.f32 %v943, %v960
      %v965 = vsub.f32 %v944, %v961
      %v966 = vsub.f32 %v945, %v962
      %v967 = vsub.f32 %v946, %v963
      %v968 = vmul.f32 %v964, %v964
      %v969 = vmul.f32 %v965, %v965
      %v970 = vmul.f32 %v966, %v966
      %v971 = vmul.f32 %v967, %v967
      %v972 = vsel %vm947, %v968, 0.0
      %973 = vadd.xlane.f32.xlu0 %v972
      %v974 = vpop.xlane.xlu0 %973
      %v975 = vsel %vm947, %v969, 0.0
      %976 = vadd.xlane.f32.xlu0 %v975
      %v977 = vpop.xlane.xlu0 %976
      %v978 = vsel %vm947, %v970, 0.0
      %979 = vadd.xlane.f32.xlu0 %v978
      %v980 = vpop.xlane.xlu0 %979
      %v981 = vsel %vm947, %v971, 0.0
      %982 = vadd.xlane.f32.xlu0 %v981
      %v983 = vpop.xlane.xlu0 %982
      %vm984 = vcmask 7168
      %985 = vst.msk [vmem:[%s206] sm:$0xff] %vm984, %v950
      %986 = vst.msk [vmem:[%s206 + $0x8] sm:$0xff] %vm984, %v953
      %987 = vst.msk [vmem:[%s206 + $0x10] sm:$0xff] %vm984, %v956
      %988 = vst.msk [vmem:[%s206 + $0x18] sm:$0xff] %vm984, %v959
      %989 = vst.msk [vmem:[%s215] sm:$0xff] %vm984, %v974
      %990 = vst.msk [vmem:[%s215 + $0x8] sm:$0xff] %vm984, %v977
      %991 = vst.msk [vmem:[%s215 + $0x10] sm:$0xff] %vm984, %v980
      %992 = vst.msk [vmem:[%s215 + $0x18] sm:$0xff] %vm984, %v983
      %p993 = scmp.lt.s32.totalorder %s19, 1
      %s994 = scalar_select %p993, %s19, 1
      %p995 = scmp.lt.s32.totalorder %s20, 0
      %s996 = scalar_select %p995, %s20, 0
      %s997 = smul.addr %s996, 4
      %s998 = smul.addr %s994, 4
      %s999 = sadd.s32 %s997, %s998
      %s1000 = smul.addr %s999, 8
      %s1001 = scalar_lea.vmem %s2, %s1000
      %p1002 = scmp.lt.s32.totalorder %s19, 1
      %s1003 = scalar_select %p1002, %s19, 1
      %p1004 = scmp.lt.s32.totalorder %s20, 0
      %s1005 = scalar_select %p1004, %s20, 0
      %s1006 = smul.addr %s1005, 4
      %s1007 = smul.addr %s1003, 4
      %s1008 = sadd.s32 %s1006, %s1007
      %s1009 = smul.addr %s1008, 8
      %s1010 = scalar_lea.vmem %s3, %s1009
      // Predicated region
      $region29: #{_lambda_.2} parent=27 // pred_check
        %p1011 = pneg %p94
      $region30: #{_lambda_.2} parent=27 // pred_check_branch
        %1013 = sbr.rel (%p1011) target = $region32
      $region31: #{_lambda_.2} parent=27 // pred_region
        _
      $region32: #{_lambda_.2} parent=27 // pred_fallthru
        _
      // Predicated region
      $region33: #{_lambda_.2} parent=27 // pred_check
        %p1014 = pneg %p122
      $region34: #{_lambda_.2} parent=27 // pred_check_branch
        %1016 = sbr.rel (%p1014) target = $region36
      $region35: #{_lambda_.2} parent=27 // pred_region
        _
      $region36: #{_lambda_.2} parent=27 // pred_fallthru
        _
    $region28: #{_lambda_.2} parent=5 // pred_fallthru
      _
    %p1017 = scmp.le.s32.totalorder 2, %s10
    // Predicated region
    $region37: #{_lambda_.2} parent=5 // pred_check
      %p1018 = pneg %p1017
    $region38: #{_lambda_.2} parent=5 // pred_check_branch
      %1020 = sbr.rel (%p1018) target = $region40
    $region39: #{_lambda_.2} parent=5 // pred_region
      %s1021 = ssub.s32 %s10, 2
      // Predicated region
      $region41: #{_lambda_.2} parent=39 // pred_check
        %p1022 = pneg %p100
      $region42: #{_lambda_.2} parent=39 // pred_check_branch
        %1024 = sbr.rel (%p1022) target = $region44
      $region43: #{_lambda_.2} parent=39 // pred_region
        %p1025 = scmp.lt.s32.totalorder %s21, 1
        %s1026 = scalar_select %p1025, %s21, 1
        %p1027 = scmp.lt.s32.totalorder %s22, 0
        %s1028 = scalar_select %p1027, %s22, 0
        %s1029 = smul.addr %s1028, 4
        %s1030 = smul.addr %s1026, 4
        %s1031 = sadd.s32 %s1029, %s1030
        %s1032 = smul.addr %s1031, 8
        %s1033 = scalar_lea.vmem %s2, %s1032
      $region44: #{_lambda_.2} parent=39 // pred_fallthru
        _
      // Predicated region
      $region45: #{_lambda_.2} parent=39 // pred_check
        %p1034 = pneg %p128
      $region46: #{_lambda_.2} parent=39 // pred_check_branch
        %1036 = sbr.rel (%p1034) target = $region48
      $region47: #{_lambda_.2} parent=39 // pred_region
        %p1037 = scmp.lt.s32.totalorder %s21, 1
        %s1038 = scalar_select %p1037, %s21, 1
        %p1039 = scmp.lt.s32.totalorder %s22, 0
        %s1040 = scalar_select %p1039, %s22, 0
        %s1041 = smul.addr %s1040, 4
        %s1042 = smul.addr %s1038, 4
        %s1043 = sadd.s32 %s1041, %s1042
        %s1044 = smul.addr %s1043, 8
        %s1045 = scalar_lea.vmem %s3, %s1044
      $region48: #{_lambda_.2} parent=39 // pred_fallthru
        _
    $region40: #{_lambda_.2} parent=5 // pred_fallthru
      _
  $region6: #{_lambda_.2} parent=0 // loop_footer
    %s14 = sadd.s32 1, %s10
  $region7: #{_lambda_.2} parent=0 // loop_footer_branch
    %9 = sbr.rel target = $region3
  $region8: #{_lambda_.2} parent=0 // loop_exit
    _

// kernel: _lambda_.3
$region0: #{_lambda_.3}
  #allocation0 [shape = 'u32[]', space=smem, size = 0x4, offset = 0x4, fixed_abs, tag = 'smem constant byte address 0x4 - core index']
  #allocation1 [shape = 'u32[72,128]{1,0:T(1,128)}', space=vmem, size = 0x9000, scoped, tag = 'internal scratch']
  %s0 = inlined_call_operand.vmem [shape: bf16[2,9,24,8], index: 0, kind: input, shape index: {}]
  %s1 = inlined_call_operand.vmem [shape: bf16[32,36], index: 1, kind: input, shape index: {}]
  %s2 = inlined_call_operand.vmem [shape: f32[32,1], index: 2, kind: input, shape index: {}]
  %s3 = inlined_call_operand.vmem [shape: f32[32,1], index: 3, kind: input, shape index: {}]
  %s4 = inlined_call_operand.vmem [shape: f32[2,32,64], index: 4, kind: output, shape index: {}]
  %s5 = sld [smem:[#allocation0]]
  $region49: #{_lambda_.3} parent=0
    _
  %s7 = ssub.s32 1, %s5
  %s8 = scalar_select 0, %s7, %s5
  loop: start=0, step=1, limit=4
  $region2: #{_lambda_.3} parent=0 // loop_pre_header
    _
  $region3: #{_lambda_.3} parent=0 // loop_header
    %s10 = sphi 0, %s14
    %p11 = scmp.ge.s32.totalorder %s10, 4
    %s17 = sphi 0, %s29
    %s18 = sphi 0, %s25
    %s19 = sphi 0, %s17
    %s20 = sphi 0, %s18
    %s21 = sphi 0, %s19
    %s22 = sphi 0, %s20
    %s32 = sphi 0, %s34
    %s35 = sphi 0, %s32
    %s36 = sphi 0, %s35
    %s52 = sphi 0, %s36
    %s56 = sphi 0, %s56
    %s58 = sphi 0, %s56
    %s59 = sphi 0, %s58
    %s73 = sphi 0, %s59
    %s77 = sphi 0, %s77
    %s79 = sphi 0, %s77
    %s80 = sphi 0, %s79
    %s94 = sphi 0, %s80
    %s98 = sphi 0, %s98
    %s100 = sphi 0, %s98
    %s101 = sphi 0, %s100
    %s115 = sphi 0, %s101
    %s123 = sphi 0, %s125
    %s126 = sphi 0, %s123
    %s127 = sphi 0, %s126
    %s143 = sphi 0, %s127
  $region4: #{_lambda_.3} parent=0 // loop_header_branch
    %13 = sbr.rel (%p11) target = $region8
  $region5: #{_lambda_.3} parent=0 // loop_body
    %s15 = ssub.s32 %s10, 1
    %s16 = ssub.s32 %s10, 2
    %s23 = sadd.s32 1, %s18
    %p24 = scmp.ge.s32.totalorder %s23, 1
    %s25 = scalar_select %p24, 0, %s23
    %s26 = sadd.s32 1, %s17
    %s27 = scalar_select %p24, %s26, %s17
    %p28 = scmp.ge.s32.totalorder %s27, 2
    %s29 = scalar_select %p28, 0, %s27
    %s30 = ssub.s32 %s17, %s29
    %p31 = scmp.eq.s32.totalorder %s30, 0
    %s33 = sadd.s32 %s32, 1
    %s34 = scalar_select %p31, %s32, %s33
    %p37 = pneg %p31
    %p38 = scmp.eq.s32.totalorder %s10, 1
    %p39 = por %p37, %p38
    %p40 = scmp.ne.s32.totalorder %s32, %s35
    %p41 = scmp.eq.s32.totalorder %s10, 0
    %p42 = por %p40, %p41
    %p43 = scmp.ne.s32.totalorder %s32, %s35
    %p44 = scmp.eq.s32.totalorder %s15, 1
    %p45 = por %p43, %p44
    %p46 = scmp.ne.s32.totalorder %s35, %s36
    %p47 = scmp.eq.s32.totalorder %s15, 0
    %p48 = por %p46, %p47
    %p49 = scmp.ne.s32.totalorder %s35, %s36
    %p50 = scmp.eq.s32.totalorder %s16, 1
    %p51 = por %p49, %p50
    %p53 = scmp.ne.s32.totalorder %s36, %s52
    %p54 = scmp.eq.s32.totalorder %s16, 0
    %p55 = por %p53, %p54
    %s57 = sadd.s32 %s56, 1
    %p60 = scmp.eq.s32.totalorder %s10, 1
    %p61 = scmp.ne.s32.totalorder %s56, %s58
    %p62 = scmp.eq.s32.totalorder %s10, 0
    %p63 = por %p61, %p62
    %p64 = scmp.ne.s32.totalorder %s56, %s58
    %p65 = scmp.eq.s32.totalorder %s15, 1
    %p66 = por %p64, %p65
    %p67 = scmp.ne.s32.totalorder %s58, %s59
    %p68 = scmp.eq.s32.totalorder %s15, 0
    %p69 = por %p67, %p68
    %p70 = scmp.ne.s32.totalorder %s58, %s59
    %p71 = scmp.eq.s32.totalorder %s16, 1
    %p72 = por %p70, %p71
    %p74 = scmp.ne.s32.totalorder %s59, %s73
    %p75 = scmp.eq.s32.totalorder %s16, 0
    %p76 = por %p74, %p75
    %s78 = sadd.s32 %s77, 1
    %p81 = scmp.eq.s32.totalorder %s10, 1
    %p82 = scmp.ne.s32.totalorder %s77, %s79
    %p83 = scmp.eq.s32.totalorder %s10, 0
    %p84 = por %p82, %p83
    %p85 = scmp.ne.s32.totalorder %s77, %s79
    %p86 = scmp.eq.s32.totalorder %s15, 1
    %p87 = por %p85, %p86
    %p88 = scmp.ne.s32.totalorder %s79, %s80
    %p89 = scmp.eq.s32.totalorder %s15, 0
    %p90 = por %p88, %p89
    %p91 = scmp.ne.s32.totalorder %s79, %s80
    %p92 = scmp.eq.s32.totalorder %s16, 1
    %p93 = por %p91, %p92
    %p95 = scmp.ne.s32.totalorder %s80, %s94
    %p96 = scmp.eq.s32.totalorder %s16, 0
    %p97 = por %p95, %p96
    %s99 = sadd.s32 %s98, 1
    %p102 = scmp.eq.s32.totalorder %s10, 1
    %p103 = scmp.ne.s32.totalorder %s98, %s100
    %p104 = scmp.eq.s32.totalorder %s10, 0
    %p105 = por %p103, %p104
    %p106 = scmp.ne.s32.totalorder %s98, %s100
    %p107 = scmp.eq.s32.totalorder %s15, 1
    %p108 = por %p106, %p107
    %p109 = scmp.ne.s32.totalorder %s100, %s101
    %p110 = scmp.eq.s32.totalorder %s15, 0
    %p111 = por %p109, %p110
    %p112 = scmp.ne.s32.totalorder %s100, %s101
    %p113 = scmp.eq.s32.totalorder %s16, 1
    %p114 = por %p112, %p113
    %p116 = scmp.ne.s32.totalorder %s101, %s115
    %p117 = scmp.eq.s32.totalorder %s16, 0
    %p118 = por %p116, %p117
    %s119 = ssub.s32 %s17, %s29
    %s120 = ssub.s32 %s18, %s25
    %s121 = sor.u32 %s119, %s120
    %p122 = scmp.eq.s32.totalorder %s121, 0
    %s124 = sadd.s32 %s123, 1
    %s125 = scalar_select %p122, %s123, %s124
    %p128 = pneg %p122
    %p129 = scmp.eq.s32.totalorder %s10, 1
    %p130 = por %p128, %p129
    %p131 = scmp.ne.s32.totalorder %s123, %s126
    %p132 = scmp.eq.s32.totalorder %s10, 0
    %p133 = por %p131, %p132
    %p134 = scmp.ne.s32.totalorder %s123, %s126
    %p135 = scmp.eq.s32.totalorder %s15, 1
    %p136 = por %p134, %p135
    %p137 = scmp.ne.s32.totalorder %s126, %s127
    %p138 = scmp.eq.s32.totalorder %s15, 0
    %p139 = por %p137, %p138
    %p140 = scmp.ne.s32.totalorder %s126, %s127
    %p141 = scmp.eq.s32.totalorder %s16, 1
    %p142 = por %p140, %p141
    %p144 = scmp.ne.s32.totalorder %s127, %s143
    %p145 = scmp.eq.s32.totalorder %s16, 0
    %p146 = por %p144, %p145
    %p147 = scmp.le.s32.totalorder 1, %s10
    %p148 = scmp.lt.s32.totalorder %s10, 3
    %p149 = pnand %p147, %p148
    %p150 = pneg %p149
    // Predicated region
    $region9: #{_lambda_.3} parent=5 // pred_check
      _
    $region10: #{_lambda_.3} parent=5 // pred_check_branch
      %152 = sbr.rel (%p149) target = $region12
    $region11: #{_lambda_.3} parent=5 // pred_region
      %s153 = ssub.s32 %s10, 1
      // Predicated region
      $region13: #{_lambda_.3} parent=11 // pred_check
        %p154 = pneg %p69
      $region14: #{_lambda_.3} parent=11 // pred_check_branch
        %156 = sbr.rel (%p154) target = $region16
      $region15: #{_lambda_.3} parent=11 // pred_region
        _
      $region16: #{_lambda_.3} parent=11 // pred_fallthru
        _
      // Predicated region
      $region17: #{_lambda_.3} parent=11 // pred_check
        %p157 = pneg %p90
      $region18: #{_lambda_.3} parent=11 // pred_check_branch
        %159 = sbr.rel (%p157) target = $region20
      $region19: #{_lambda_.3} parent=11 // pred_region
        _
      $region20: #{_lambda_.3} parent=11 // pred_fallthru
        _
      // Predicated region
      $region21: #{_lambda_.3} parent=11 // pred_check
        %p160 = pneg %p111
      $region22: #{_lambda_.3} parent=11 // pred_check_branch
        %162 = sbr.rel (%p160) target = $region24
      $region23: #{_lambda_.3} parent=11 // pred_region
        _
      $region24: #{_lambda_.3} parent=11 // pred_fallthru
        _
    $region12: #{_lambda_.3} parent=5 // pred_fallthru
      _
    %p163 = scmp.lt.s32.totalorder %s10, 2
    // Predicated region
    $region25: #{_lambda_.3} parent=5 // pred_check
      %p164 = pneg %p163
    $region26: #{_lambda_.3} parent=5 // pred_check_branch
      %166 = sbr.rel (%p164) target = $region28
    $region27: #{_lambda_.3} parent=5 // pred_region
      // Predicated region
      $region29: #{_lambda_.3} parent=27 // pred_check
        %p167 = pneg %p42
      $region30: #{_lambda_.3} parent=27 // pred_check_branch
        %169 = sbr.rel (%p167) target = $region32
      $region31: #{_lambda_.3} parent=27 // pred_region
        %p170 = scmp.lt.s32.totalorder %s17, 1
        %s171 = scalar_select %p170, %s17, 1
        %s172 = smul.addr %s171, 27
        %s173 = smul.addr %s172, 4
        %s174 = scalar_lea.vmem %s0, %s173
      $region32: #{_lambda_.3} parent=27 // pred_fallthru
        _
    $region28: #{_lambda_.3} parent=5 // pred_fallthru
      _
    %p175 = scmp.le.s32.totalorder 1, %s10
    %p176 = scmp.lt.s32.totalorder %s10, 3
    %p177 = pnand %p175, %p176
    %p178 = pneg %p177
    // Predicated region
    $region33: #{_lambda_.3} parent=5 // pred_check
      _
    $region34: #{_lambda_.3} parent=5 // pred_check_branch
      %180 = sbr.rel (%p177) target = $region36
    $region35: #{_lambda_.3} parent=5 // pred_region
      %s181 = ssub.s32 %s10, 1
      %p182 = scmp.lt.s32.totalorder %s19, 1
      %s183 = scalar_select %p182, %s19, 1
      %s184 = smul.addr %s183, 27
      %s185 = smul.addr %s184, 4
      %s186 = scalar_lea.vmem %s0, %s185
      %p187 = pneg %p48
      %p188 = pneg %p45
      %p189 = pneg %p69
      %p190 = pneg %p66
      %p191 = pneg %p90
      %p192 = pneg %p87
      %p193 = pneg %p111
      %p194 = pneg %p108
      %p195 = pneg %p139
      %p196 = pneg %p136
      %p197 = scmp.lt.s32.totalorder %s19, 1
      %s198 = scalar_select %p197, %s19, 1
      %p199 = scmp.lt.s32.totalorder %s20, 0
      %s200 = scalar_select %p199, %s20, 0
      %s201 = smul.addr %s198, 4
      %s202 = sadd.s32 %s200, %s201
      %s203 = smul.addr %s202, 8
      %s204 = scalar_lea.vmem %s4, %s203
      %p205 = scmp.lt.s32.totalorder %s19, 1
      %s206 = scalar_select %p205, %s19, 1
      %s207 = smul.addr %s206, 27
      %s208 = smul.addr %s207, 4
      %s209 = scalar_lea.vmem %s0, %s208
      %p210 = scmp.lt.s32.totalorder %s19, 1
      %s211 = scalar_select %p210, %s19, 1
      %p212 = scmp.lt.s32.totalorder %s20, 0
      %s213 = scalar_select %p212, %s20, 0
      %s214 = smul.addr %s211, 4
      %s215 = sadd.s32 %s213, %s214
      %s216 = smul.addr %s215, 8
      %s217 = scalar_lea.vmem %s4, %s216
      %s219 = smul.u32 %s20, 8
      %v220 = vld [vmem:[%s1] sm:$0xf]
      %v221 = vld [vmem:[%s1 + $0x4] sm:$0xf]
      %v222 = vld [vmem:[%s1 + $0x8] sm:$0xf]
      %v223 = vld [vmem:[%s1 + $0xc] sm:$0xf]
      %v224 = vld [vmem:[%s2] sm:$0xff]
      %v225 = vld [vmem:[%s2 + $0x8] sm:$0xff]
      %v226 = vld [vmem:[%s2 + $0x10] sm:$0xff]
      %v227 = vld [vmem:[%s2 + $0x18] sm:$0xff]
      %v228 = vld [vmem:[%s3] sm:$0xff]
      %v229 = vld [vmem:[%s3 + $0x8] sm:$0xff]
      %v230 = vld [vmem:[%s3 + $0x10] sm:$0xff]
      %v231 = vld [vmem:[%s3 + $0x18] sm:$0xff]
      %s232 = smul.u32 %s219, 3
      %s233 = smul.addr %s232, 4
      %s234 = scalar_lea.vmem %s209, %s233
      %v235 = vld [vmem:[%s234] sm:$0xf]
      %v236 = vld [vmem:[%s234 + $0x4] sm:$0xf]
      %v237 = vld [vmem:[%s234 + $0x8] sm:$0xf]
      %s238 = sadd.s32 %s219, 1
      %s239 = smul.u32 %s238, 3
      %s240 = smul.addr %s239, 4
      %s241 = scalar_lea.vmem %s209, %s240
      %v242 = vld [vmem:[%s241] sm:$0xf]
      %v243 = vld [vmem:[%s241 + $0x4] sm:$0x3]
      %v248 = vunpack.c.l.b16 %v220
      %v249 = vunpack.c.l.b16 %v221
      %v250 = vunpack.c.l.b16 %v222
      %v251 = vunpack.c.l.b16 %v223
      %v252 = vpack.c.b16 %v249, %v248
      %v253 = vpack.c.b16 %v251, %v250
      %254 = vrot.lane.b32.xlu0 %v252, 104
      %v255 = vpop.permute.xlu0 %254
      %256 = vrot.lane.b32.xlu0 %v253, 104
      %v257 = vpop.permute.xlu0 %256
      %v260 = vunpack.c.l.b16 %v242
      %v261 = vunpack.c.l.b16 %v243
      %v262 = vpack.c.b16 %v261, %v260
      %vm263 = vcmask 97280
      %v265 = vsel %vm263, %v255, 0
      %v268 = vsel %vm263, %v257, 0
      %vm270 = vcmask 1045504
      %v272 = vsel %vm270, %v262, 0
      %274 = vmatpush.bf16.msra.mxu0 0
      %275 = vmatpush.bf16.msra.mxu0 0
      %276 = vmatpush.bf16.msra.mxu0 0
      %277 = vmatpush.bf16.msra.mxu0 0
      %278 = vmatpush.bf16.msra.mxu0 0
      %279 = vmatpush.bf16.msra.mxu0 0
      %280 = vmatpush.bf16.msra.mxu0 0
      %281 = vmatpush.bf16.msra.mxu0 %v272
      %282 = vmatmul.bf16.gmra.mxu0 %v265
      %v283 = vpop.f32.mrf.mxu0
      %v284 = vadd.f32 0.0, %v283
      %v285 = vpop.f32.mrf.mxu0
      %v286 = vadd.f32 0.0, %v285
      %287 = vmatmul.bf16.gmra.mxu0 %v268
      %v288 = vpop.f32.mrf.mxu0
      %v289 = vadd.f32 0.0, %v288
      %v290 = vpop.f32.mrf.mxu0
      %v291 = vadd.f32 0.0, %v290
      %292 = vdwg.mxu0
      %v296 = vunpack.c.l.b16 %v235
      %v297 = vunpack.c.l.b16 %v236
      %v298 = vunpack.c.l.b16 %v237
      %v299 = vpack.c.b16 %v297, %v296
      %v300 = vpack.c.b16 %v298, %v298
      %vm302 = vcmask 195584
      %v304 = vsel %vm302, %v252, 0
      %v307 = vsel %vm302, %v253, 0
      %vm309 = vcmask 1043456
      %v311 = vsel %vm309, %v300, 0
      %313 = vmatpush.bf16.msra.mxu0 0
      %314 = vmatpush.bf16.msra.mxu0 0
      %315 = vmatpush.bf16.msra.mxu0 0
      %316 = vmatpush.bf16.msra.mxu0 0
      %317 = vmatpush.bf16.msra.mxu0 0
      %318 = vmatpush.bf16.msra.mxu0 0
      %319 = vmatpush.bf16.msra.mxu0 %v311
      %320 = vmatpush.bf16.msra.mxu0 %v299
      %321 = vmatmul.bf16.gmra.mxu0 %v304
      %v322 = vpop.f32.mrf.mxu0
      %v323 = vadd.f32 %v284, %v322
      %v324 = vpop.f32.mrf.mxu0
      %v325 = vadd.f32 %v286, %v324
      %326 = vmatmul.bf16.gmra.mxu0 %v307
      %v327 = vpop.f32.mrf.mxu0
      %v328 = vadd.f32 %v289, %v327
      %v329 = vpop.f32.mrf.mxu0
      %v330 = vadd.f32 %v291, %v329
      %331 = vdwg.mxu0
      %333 = vset.pattern.permute.xlu0 0
      %334 = vperm.xlu0 %333, %v224
      %v335 = vpop.permute.xlu0 %334
      %338 = vset.pattern.permute.xlu0 0
      %339 = vperm.xlu0 %338, %v225
      %v340 = vpop.permute.xlu0 %339
      %343 = vset.pattern.permute.xlu0 0
      %344 = vperm.xlu0 %343, %v226
      %v345 = vpop.permute.xlu0 %344
      %348 = vset.pattern.permute.xlu0 0
      %349 = vperm.xlu0 %348, %v227
      %v350 = vpop.permute.xlu0 %349
      %v352 = vmul.f32 %v323, %v335
      %v353 = vmul.f32 %v325, %v340
      %v354 = vmul.f32 %v328, %v345
      %v355 = vmul.f32 %v330, %v350
      %357 = vset.pattern.permute.xlu0 0
      %358 = vperm.xlu0 %357, %v228
      %v359 = vpop.permute.xlu0 %358
      %362 = vset.pattern.permute.xlu0 0
      %363 = vperm.xlu0 %362, %v229
      %v364 = vpop.permute.xlu0 %363
      %367 = vset.pattern.permute.xlu0 0
      %368 = vperm.xlu0 %367, %v230
      %v369 = vpop.permute.xlu0 %368
      %372 = vset.pattern.permute.xlu0 0
      %373 = vperm.xlu0 %372, %v231
      %v374 = vpop.permute.xlu0 %373
      %v376 = vadd.f32 %v352, %v359
      %v377 = vadd.f32 %v353, %v364
      %v378 = vadd.f32 %v354, %v369
      %v379 = vadd.f32 %v355, %v374
      %v380 = vmax.f32 %v376, 0.0
      %v381 = vmax.f32 %v377, 0.0
      %v382 = vmax.f32 %v378, 0.0
      %v383 = vmax.f32 %v379, 0.0
      %vm384 = vcmask 64512
      %385 = vst.msk [vmem:[%s217] sm:$0xff] %vm384, %v380
      %386 = vst.msk [vmem:[%s217 + $0x8] sm:$0xff] %vm384, %v381
      %387 = vst.msk [vmem:[%s217 + $0x10] sm:$0xff] %vm384, %v382
      %388 = vst.msk [vmem:[%s217 + $0x18] sm:$0xff] %vm384, %v383
      %v389 = vld [vmem:[%s241] sm:$0xf]
      %v390 = vld [vmem:[%s241 + $0x4] sm:$0xf]
      %v391 = vld [vmem:[%s241 + $0x8] sm:$0xf]
      %s392 = sadd.s32 %s219, 2
      %s393 = smul.u32 %s392, 3
      %s394 = smul.addr %s393, 4
      %s395 = scalar_lea.vmem %s209, %s394
      %v396 = vld [vmem:[%s395] sm:$0xf]
      %v397 = vld [vmem:[%s395 + $0x4] sm:$0x3]
      %v400 = vunpack.c.l.b16 %v396
      %v401 = vunpack.c.l.b16 %v397
      %v402 = vpack.c.b16 %v401, %v400
      %v404 = vsel %vm270, %v402, 0
      %406 = vmatpush.bf16.msra.mxu0 0
      %407 = vmatpush.bf16.msra.mxu0 0
      %408 = vmatpush.bf16.msra.mxu0 0
      %409 = vmatpush.bf16.msra.mxu0 0
      %410 = vmatpush.bf16.msra.mxu0 0
      %411 = vmatpush.bf16.msra.mxu0 0
      %412 = vmatpush.bf16.msra.mxu0 0
      %413 = vmatpush.bf16.msra.mxu0 %v404
      %414 = vmatmul.bf16.gmra.mxu0 %v265
      %v415 = vpop.f32.mrf.mxu0
      %v416 = vadd.f32 0.0, %v415
      %v417 = vpop.f32.mrf.mxu0
      %v418 = vadd.f32 0.0, %v417
      %419 = vmatmul.bf16.gmra.mxu0 %v268
      %v420 = vpop.f32.mrf.mxu0
      %v421 = vadd.f32 0.0, %v420
      %v422 = vpop.f32.mrf.mxu0
      %v423 = vadd.f32 0.0, %v422
      %424 = vdwg.mxu0
      %v428 = vunpack.c.l.b16 %v389
      %v429 = vunpack.c.l.b16 %v390
      %v430 = vunpack.c.l.b16 %v391
      %v431 = vpack.c.b16 %v429, %v428
      %v432 = vpack.c.b16 %v430, %v430
      %v435 = vsel %vm309, %v432, 0
      %437 = vmatpush.bf16.msra.mxu0 0
      %438 = vmatpush.bf16.msra.mxu0 0
      %439 = vmatpush.bf16.msra.mxu0 0
      %440 = vmatpush.bf16.msra.mxu0 0
      %441 = vmatpush.bf16.msra.mxu0 0
      %442 = vmatpush.bf16.msra.mxu0 0
      %443 = vmatpush.bf16.msra.mxu0 %v435
      %444 = vmatpush.bf16.msra.mxu0 %v431
      %445 = vmatmul.bf16.gmra.mxu0 %v304
      %v446 = vpop.f32.mrf.mxu0
      %v447 = vadd.f32 %v416, %v446
      %v448 = vpop.f32.mrf.mxu0
      %v449 = vadd.f32 %v418, %v448
      %450 = vmatmul.bf16.gmra.mxu0 %v307
      %v451 = vpop.f32.mrf.mxu0
      %v452 = vadd.f32 %v421, %v451
      %v453 = vpop.f32.mrf.mxu0
      %v454 = vadd.f32 %v423, %v453
      %455 = vdwg.mxu0
      %v456 = vmul.f32 %v447, %v335
      %v457 = vmul.f32 %v449, %v340
      %v458 = vmul.f32 %v452, %v345
      %v459 = vmul.f32 %v454, %v350
      %v460 = vadd.f32 %v456, %v359
      %v461 = vadd.f32 %v457, %v364
      %v462 = vadd.f32 %v458, %v369
      %v463 = vadd.f32 %v459, %v374
      %v464 = vmax.f32 %v460, 0.0
      %v465 = vmax.f32 %v461, 0.0
      %v466 = vmax.f32 %v462, 0.0
      %v467 = vmax.f32 %v463, 0.0
      %472 = vrot.lane.b32.xlu0 %v464, 8
      %v473 = vpop.permute.xlu0 %472
      %474 = vrot.lane.b32.xlu0 %v465, 8
      %v475 = vpop.permute.xlu0 %474
      %476 = vrot.lane.b32.xlu0 %v466, 8
      %v477 = vpop.permute.xlu0 %476
      %478 = vrot.lane.b32.xlu0 %v467, 8
      %v479 = vpop.permute.xlu0 %478
      %vm484 = vcmask 130112
      %485 = vst.msk [vmem:[%s217] sm:$0xff] %vm484, %v473
      %486 = vst.msk [vmem:[%s217 + $0x8] sm:$0xff] %vm484, %v475
      %487 = vst.msk [vmem:[%s217 + $0x10] sm:$0xff] %vm484, %v477
      %488 = vst.msk [vmem:[%s217 + $0x18] sm:$0xff] %vm484, %v479
      %v489 = vld [vmem:[%s395] sm:$0xf]
      %v490 = vld [vmem:[%s395 + $0x4] sm:$0xf]
      %v491 = vld [vmem:[%s395 + $0x8] sm:$0xf]
      %s492 = sadd.s32 %s219, 3
      %s493 = smul.u32 %s492, 3
      %s494 = smul.addr %s493, 4
      %s495 = scalar_lea.vmem %s209, %s494
      %v496 = vld [vmem:[%s495] sm:$0xf]
      %v497 = vld [vmem:[%s495 + $0x4] sm:$0x3]
      %v500 = vunpack.c.l.b16 %v496
      %v501 = vunpack.c.l.b16 %v497
      %v502 = vpack.c.b16 %v501, %v500
      %v504 = vsel %vm270, %v502, 0
      %506 = vmatpush.bf16.msra.mxu0 0
      %507 = vmatpush.bf16.msra.mxu0 0
      %508 = vmatpush.bf16.msra.mxu0 0
      %509 = vmatpush.bf16.msra.mxu0 0
      %510 = vmatpush.bf16.msra.mxu0 0
      %511 = vmatpush.bf16.msra.mxu0 0
      %512 = vmatpush.bf16.msra.mxu0 0
      %513 = vmatpush.bf16.msra.mxu0 %v504
      %514 = vmatmul.bf16.gmra.mxu0 %v265
      %v515 = vpop.f32.mrf.mxu0
      %v516 = vadd.f32 0.0, %v515
      %v517 = vpop.f32.mrf.mxu0
      %v518 = vadd.f32 0.0, %v517
      %519 = vmatmul.bf16.gmra.mxu0 %v268
      %v520 = vpop.f32.mrf.mxu0
      %v521 = vadd.f32 0.0, %v520
      %v522 = vpop.f32.mrf.mxu0
      %v523 = vadd.f32 0.0, %v522
      %524 = vdwg.mxu0
      %v528 = vunpack.c.l.b16 %v489
      %v529 = vunpack.c.l.b16 %v490
      %v530 = vunpack.c.l.b16 %v491
      %v531 = vpack.c.b16 %v529, %v528
      %v532 = vpack.c.b16 %v530, %v530
      %v535 = vsel %vm309, %v532, 0
      %537 = vmatpush.bf16.msra.mxu0 0
      %538 = vmatpush.bf16.msra.mxu0 0
      %539 = vmatpush.bf16.msra.mxu0 0
      %540 = vmatpush.bf16.msra.mxu0 0
      %541 = vmatpush.bf16.msra.mxu0 0
      %542 = vmatpush.bf16.msra.mxu0 0
      %543 = vmatpush.bf16.msra.mxu0 %v535
      %544 = vmatpush.bf16.msra.mxu0 %v531
      %545 = vmatmul.bf16.gmra.mxu0 %v304
      %v546 = vpop.f32.mrf.mxu0
      %v547 = vadd.f32 %v516, %v546
      %v548 = vpop.f32.mrf.mxu0
      %v549 = vadd.f32 %v518, %v548
      %550 = vmatmul.bf16.gmra.mxu0 %v307
      %v551 = vpop.f32.mrf.mxu0
      %v552 = vadd.f32 %v521, %v551
      %v553 = vpop.f32.mrf.mxu0
      %v554 = vadd.f32 %v523, %v553
      %555 = vdwg.mxu0
      %v556 = vmul.f32 %v547, %v335
      %v557 = vmul.f32 %v549, %v340
      %v558 = vmul.f32 %v552, %v345
      %v559 = vmul.f32 %v554, %v350
      %v560 = vadd.f32 %v556, %v359
      %v561 = vadd.f32 %v557, %v364
      %v562 = vadd.f32 %v558, %v369
      %v563 = vadd.f32 %v559, %v374
      %v564 = vmax.f32 %v560, 0.0
      %v565 = vmax.f32 %v561, 0.0
      %v566 = vmax.f32 %v562, 0.0
      %v567 = vmax.f32 %v563, 0.0
      %572 = vrot.lane.b32.xlu0 %v564, 16
      %v573 = vpop.permute.xlu0 %572
      %574 = vrot.lane.b32.xlu0 %v565, 16
      %v575 = vpop.permute.xlu0 %574
      %576 = vrot.lane.b32.xlu0 %v566, 16
      %v577 = vpop.permute.xlu0 %576
      %578 = vrot.lane.b32.xlu0 %v567, 16
      %v579 = vpop.permute.xlu0 %578
      %vm584 = vcmask 195712
      %585 = vst.msk [vmem:[%s217] sm:$0xff] %vm584, %v573
      %586 = vst.msk [vmem:[%s217 + $0x8] sm:$0xff] %vm584, %v575
      %587 = vst.msk [vmem:[%s217 + $0x10] sm:$0xff] %vm584, %v577
      %588 = vst.msk [vmem:[%s217 + $0x18] sm:$0xff] %vm584, %v579
      %v589 = vld [vmem:[%s495] sm:$0xf]
      %v590 = vld [vmem:[%s495 + $0x4] sm:$0xf]
      %v591 = vld [vmem:[%s495 + $0x8] sm:$0xf]
      %s592 = sadd.s32 %s219, 4
      %s593 = smul.u32 %s592, 3
      %s594 = smul.addr %s593, 4
      %s595 = scalar_lea.vmem %s209, %s594
      %v596 = vld [vmem:[%s595] sm:$0xf]
      %v597 = vld [vmem:[%s595 + $0x4] sm:$0x3]
      %v600 = vunpack.c.l.b16 %v596
      %v601 = vunpack.c.l.b16 %v597
      %v602 = vpack.c.b16 %v601, %v600
      %v604 = vsel %vm270, %v602, 0
      %606 = vmatpush.bf16.msra.mxu0 0
      %607 = vmatpush.bf16.msra.mxu0 0
      %608 = vmatpush.bf16.msra.mxu0 0
      %609 = vmatpush.bf16.msra.mxu0 0
      %610 = vmatpush.bf16.msra.mxu0 0
      %611 = vmatpush.bf16.msra.mxu0 0
      %612 = vmatpush.bf16.msra.mxu0 0
      %613 = vmatpush.bf16.msra.mxu0 %v604
      %614 = vmatmul.bf16.gmra.mxu0 %v265
      %v615 = vpop.f32.mrf.mxu0
      %v616 = vadd.f32 0.0, %v615
      %v617 = vpop.f32.mrf.mxu0
      %v618 = vadd.f32 0.0, %v617
      %619 = vmatmul.bf16.gmra.mxu0 %v268
      %v620 = vpop.f32.mrf.mxu0
      %v621 = vadd.f32 0.0, %v620
      %v622 = vpop.f32.mrf.mxu0
      %v623 = vadd.f32 0.0, %v622
      %624 = vdwg.mxu0
      %v628 = vunpack.c.l.b16 %v589
      %v629 = vunpack.c.l.b16 %v590
      %v630 = vunpack.c.l.b16 %v591
      %v631 = vpack.c.b16 %v629, %v628
      %v632 = vpack.c.b16 %v630, %v630
      %v635 = vsel %vm309, %v632, 0
      %637 = vmatpush.bf16.msra.mxu0 0
      %638 = vmatpush.bf16.msra.mxu0 0
      %639 = vmatpush.bf16.msra.mxu0 0
      %640 = vmatpush.bf16.msra.mxu0 0
      %641 = vmatpush.bf16.msra.mxu0 0
      %642 = vmatpush.bf16.msra.mxu0 0
      %643 = vmatpush.bf16.msra.mxu0 %v635
      %644 = vmatpush.bf16.msra.mxu0 %v631
      %645 = vmatmul.bf16.gmra.mxu0 %v304
      %v646 = vpop.f32.mrf.mxu0
      %v647 = vadd.f32 %v616, %v646
      %v648 = vpop.f32.mrf.mxu0
      %v649 = vadd.f32 %v618, %v648
      %650 = vmatmul.bf16.gmra.mxu0 %v307
      %v651 = vpop.f32.mrf.mxu0
      %v652 = vadd.f32 %v621, %v651
      %v653 = vpop.f32.mrf.mxu0
      %v654 = vadd.f32 %v623, %v653
      %655 = vdwg.mxu0
      %v656 = vmul.f32 %v647, %v335
      %v657 = vmul.f32 %v649, %v340
      %v658 = vmul.f32 %v652, %v345
      %v659 = vmul.f32 %v654, %v350
      %v660 = vadd.f32 %v656, %v359
      %v661 = vadd.f32 %v657, %v364
      %v662 = vadd.f32 %v658, %v369
      %v663 = vadd.f32 %v659, %v374
      %v664 = vmax.f32 %v660, 0.0
      %v665 = vmax.f32 %v661, 0.0
      %v666 = vmax.f32 %v662, 0.0
      %v667 = vmax.f32 %v663, 0.0
      %672 = vrot.lane.b32.xlu0 %v664, 24
      %v673 = vpop.permute.xlu0 %672
      %674 = vrot.lane.b32.xlu0 %v665, 24
      %v675 = vpop.permute.xlu0 %674
      %676 = vrot.lane.b32.xlu0 %v666, 24
      %v677 = vpop.permute.xlu0 %676
      %678 = vrot.lane.b32.xlu0 %v667, 24
      %v679 = vpop.permute.xlu0 %678
      %vm684 = vcmask 261312
      %685 = vst.msk [vmem:[%s217] sm:$0xff] %vm684, %v673
      %686 = vst.msk [vmem:[%s217 + $0x8] sm:$0xff] %vm684, %v675
      %687 = vst.msk [vmem:[%s217 + $0x10] sm:$0xff] %vm684, %v677
      %688 = vst.msk [vmem:[%s217 + $0x18] sm:$0xff] %vm684, %v679
      %v689 = vld [vmem:[%s595] sm:$0xf]
      %v690 = vld [vmem:[%s595 + $0x4] sm:$0xf]
      %v691 = vld [vmem:[%s595 + $0x8] sm:$0xf]
      %s692 = sadd.s32 %s219, 5
      %s693 = smul.u32 %s692, 3
      %s694 = smul.addr %s693, 4
      %s695 = scalar_lea.vmem %s209, %s694
      %v696 = vld [vmem:[%s695] sm:$0xf]
      %v697 = vld [vmem:[%s695 + $0x4] sm:$0x3]
      %v700 = vunpack.c.l.b16 %v696
      %v701 = vunpack.c.l.b16 %v697
      %v702 = vpack.c.b16 %v701, %v700
      %v704 = vsel %vm270, %v702, 0
      %706 = vmatpush.bf16.msra.mxu0 0
      %707 = vmatpush.bf16.msra.mxu0 0
      %708 = vmatpush.bf16.msra.mxu0 0
      %709 = vmatpush.bf16.msra.mxu0 0
      %710 = vmatpush.bf16.msra.mxu0 0
      %711 = vmatpush.bf16.msra.mxu0 0
      %712 = vmatpush.bf16.msra.mxu0 0
      %713 = vmatpush.bf16.msra.mxu0 %v704
      %714 = vmatmul.bf16.gmra.mxu0 %v265
      %v715 = vpop.f32.mrf.mxu0
      %v716 = vadd.f32 0.0, %v715
      %v717 = vpop.f32.mrf.mxu0
      %v718 = vadd.f32 0.0, %v717
      %719 = vmatmul.bf16.gmra.mxu0 %v268
      %v720 = vpop.f32.mrf.mxu0
      %v721 = vadd.f32 0.0, %v720
      %v722 = vpop.f32.mrf.mxu0
      %v723 = vadd.f32 0.0, %v722
      %724 = vdwg.mxu0
      %v728 = vunpack.c.l.b16 %v689
      %v729 = vunpack.c.l.b16 %v690
      %v730 = vunpack.c.l.b16 %v691
      %v731 = vpack.c.b16 %v729, %v728
      %v732 = vpack.c.b16 %v730, %v730
      %v735 = vsel %vm309, %v732, 0
      %737 = vmatpush.bf16.msra.mxu0 0
      %738 = vmatpush.bf16.msra.mxu0 0
      %739 = vmatpush.bf16.msra.mxu0 0
      %740 = vmatpush.bf16.msra.mxu0 0
      %741 = vmatpush.bf16.msra.mxu0 0
      %742 = vmatpush.bf16.msra.mxu0 0
      %743 = vmatpush.bf16.msra.mxu0 %v735
      %744 = vmatpush.bf16.msra.mxu0 %v731
      %745 = vmatmul.bf16.gmra.mxu0 %v304
      %v746 = vpop.f32.mrf.mxu0
      %v747 = vadd.f32 %v716, %v746
      %v748 = vpop.f32.mrf.mxu0
      %v749 = vadd.f32 %v718, %v748
      %750 = vmatmul.bf16.gmra.mxu0 %v307
      %v751 = vpop.f32.mrf.mxu0
      %v752 = vadd.f32 %v721, %v751
      %v753 = vpop.f32.mrf.mxu0
      %v754 = vadd.f32 %v723, %v753
      %755 = vdwg.mxu0
      %v756 = vmul.f32 %v747, %v335
      %v757 = vmul.f32 %v749, %v340
      %v758 = vmul.f32 %v752, %v345
      %v759 = vmul.f32 %v754, %v350
      %v760 = vadd.f32 %v756, %v359
      %v761 = vadd.f32 %v757, %v364
      %v762 = vadd.f32 %v758, %v369
      %v763 = vadd.f32 %v759, %v374
      %v764 = vmax.f32 %v760, 0.0
      %v765 = vmax.f32 %v761, 0.0
      %v766 = vmax.f32 %v762, 0.0
      %v767 = vmax.f32 %v763, 0.0
      %772 = vrot.lane.b32.xlu0 %v764, 32
      %v773 = vpop.permute.xlu0 %772
      %774 = vrot.lane.b32.xlu0 %v765, 32
      %v775 = vpop.permute.xlu0 %774
      %776 = vrot.lane.b32.xlu0 %v766, 32
      %v777 = vpop.permute.xlu0 %776
      %778 = vrot.lane.b32.xlu0 %v767, 32
      %v779 = vpop.permute.xlu0 %778
      %vm784 = vcmask 326912
      %785 = vst.msk [vmem:[%s217] sm:$0xff] %vm784, %v773
      %786 = vst.msk [vmem:[%s217 + $0x8] sm:$0xff] %vm784, %v775
      %787 = vst.msk [vmem:[%s217 + $0x10] sm:$0xff] %vm784, %v777
      %788 = vst.msk [vmem:[%s217 + $0x18] sm:$0xff] %vm784, %v779
      %v789 = vld [vmem:[%s695] sm:$0xf]
      %v790 = vld [vmem:[%s695 + $0x4] sm:$0xf]
      %v791 = vld [vmem:[%s695 + $0x8] sm:$0xf]
      %s792 = sadd.s32 %s219, 6
      %s793 = smul.u32 %s792, 3
      %s794 = smul.addr %s793, 4
      %s795 = scalar_lea.vmem %s209, %s794
      %v796 = vld [vmem:[%s795] sm:$0xf]
      %v797 = vld [vmem:[%s795 + $0x4] sm:$0x3]
      %v800 = vunpack.c.l.b16 %v796
      %v801 = vunpack.c.l.b16 %v797
      %v802 = vpack.c.b16 %v801, %v800
      %v804 = vsel %vm270, %v802, 0
      %806 = vmatpush.bf16.msra.mxu0 0
      %807 = vmatpush.bf16.msra.mxu0 0
      %808 = vmatpush.bf16.msra.mxu0 0
      %809 = vmatpush.bf16.msra.mxu0 0
      %810 = vmatpush.bf16.msra.mxu0 0
      %811 = vmatpush.bf16.msra.mxu0 0
      %812 = vmatpush.bf16.msra.mxu0 0
      %813 = vmatpush.bf16.msra.mxu0 %v804
      %814 = vmatmul.bf16.gmra.mxu0 %v265
      %v815 = vpop.f32.mrf.mxu0
      %v816 = vadd.f32 0.0, %v815
      %v817 = vpop.f32.mrf.mxu0
      %v818 = vadd.f32 0.0, %v817
      %819 = vmatmul.bf16.gmra.mxu0 %v268
      %v820 = vpop.f32.mrf.mxu0
      %v821 = vadd.f32 0.0, %v820
      %v822 = vpop.f32.mrf.mxu0
      %v823 = vadd.f32 0.0, %v822
      %824 = vdwg.mxu0
      %v828 = vunpack.c.l.b16 %v789
      %v829 = vunpack.c.l.b16 %v790
      %v830 = vunpack.c.l.b16 %v791
      %v831 = vpack.c.b16 %v829, %v828
      %v832 = vpack.c.b16 %v830, %v830
      %v835 = vsel %vm309, %v832, 0
      %837 = vmatpush.bf16.msra.mxu0 0
      %838 = vmatpush.bf16.msra.mxu0 0
      %839 = vmatpush.bf16.msra.mxu0 0
      %840 = vmatpush.bf16.msra.mxu0 0
      %841 = vmatpush.bf16.msra.mxu0 0
      %842 = vmatpush.bf16.msra.mxu0 0
      %843 = vmatpush.bf16.msra.mxu0 %v835
      %844 = vmatpush.bf16.msra.mxu0 %v831
      %845 = vmatmul.bf16.gmra.mxu0 %v304
      %v846 = vpop.f32.mrf.mxu0
      %v847 = vadd.f32 %v816, %v846
      %v848 = vpop.f32.mrf.mxu0
      %v849 = vadd.f32 %v818, %v848
      %850 = vmatmul.bf16.gmra.mxu0 %v307
      %v851 = vpop.f32.mrf.mxu0
      %v852 = vadd.f32 %v821, %v851
      %v853 = vpop.f32.mrf.mxu0
      %v854 = vadd.f32 %v823, %v853
      %855 = vdwg.mxu0
      %v856 = vmul.f32 %v847, %v335
      %v857 = vmul.f32 %v849, %v340
      %v858 = vmul.f32 %v852, %v345
      %v859 = vmul.f32 %v854, %v350
      %v860 = vadd.f32 %v856, %v359
      %v861 = vadd.f32 %v857, %v364
      %v862 = vadd.f32 %v858, %v369
      %v863 = vadd.f32 %v859, %v374
      %v864 = vmax.f32 %v860, 0.0
      %v865 = vmax.f32 %v861, 0.0
      %v866 = vmax.f32 %v862, 0.0
      %v867 = vmax.f32 %v863, 0.0
      %872 = vrot.lane.b32.xlu0 %v864, 40
      %v873 = vpop.permute.xlu0 %872
      %874 = vrot.lane.b32.xlu0 %v865, 40
      %v875 = vpop.permute.xlu0 %874
      %876 = vrot.lane.b32.xlu0 %v866, 40
      %v877 = vpop.permute.xlu0 %876
      %878 = vrot.lane.b32.xlu0 %v867, 40
      %v879 = vpop.permute.xlu0 %878
      %vm884 = vcmask 392512
      %885 = vst.msk [vmem:[%s217] sm:$0xff] %vm884, %v873
      %886 = vst.msk [vmem:[%s217 + $0x8] sm:$0xff] %vm884, %v875
      %887 = vst.msk [vmem:[%s217 + $0x10] sm:$0xff] %vm884, %v877
      %888 = vst.msk [vmem:[%s217 + $0x18] sm:$0xff] %vm884, %v879
      %v889 = vld [vmem:[%s795] sm:$0xf]
      %v890 = vld [vmem:[%s795 + $0x4] sm:$0xf]
      %v891 = vld [vmem:[%s795 + $0x8] sm:$0xf]
      %s892 = sadd.s32 %s219, 7
      %s893 = smul.u32 %s892, 3
      %s894 = smul.addr %s893, 4
      %s895 = scalar_lea.vmem %s209, %s894
      %v896 = vld [vmem:[%s895] sm:$0xf]
      %v897 = vld [vmem:[%s895 + $0x4] sm:$0x3]
      %v900 = vunpack.c.l.b16 %v896
      %v901 = vunpack.c.l.b16 %v897
      %v902 = vpack.c.b16 %v901, %v900
      %v904 = vsel %vm270, %v902, 0
      %906 = vmatpush.bf16.msra.mxu0 0
      %907 = vmatpush.bf16.msra.mxu0 0
      %908 = vmatpush.bf16.msra.mxu0 0
      %909 = vmatpush.bf16.msra.mxu0 0
      %910 = vmatpush.bf16.msra.mxu0 0
      %911 = vmatpush.bf16.msra.mxu0 0
      %912 = vmatpush.bf16.msra.mxu0 0
      %913 = vmatpush.bf16.msra.mxu0 %v904
      %914 = vmatmul.bf16.gmra.mxu0 %v265
      %v915 = vpop.f32.mrf.mxu0
      %v916 = vadd.f32 0.0, %v915
      %v917 = vpop.f32.mrf.mxu0
      %v918 = vadd.f32 0.0, %v917
      %919 = vmatmul.bf16.gmra.mxu0 %v268
      %v920 = vpop.f32.mrf.mxu0
      %v921 = vadd.f32 0.0, %v920
      %v922 = vpop.f32.mrf.mxu0
      %v923 = vadd.f32 0.0, %v922
      %924 = vdwg.mxu0
      %v928 = vunpack.c.l.b16 %v889
      %v929 = vunpack.c.l.b16 %v890
      %v930 = vunpack.c.l.b16 %v891
      %v931 = vpack.c.b16 %v929, %v928
      %v932 = vpack.c.b16 %v930, %v930
      %v935 = vsel %vm309, %v932, 0
      %937 = vmatpush.bf16.msra.mxu0 0
      %938 = vmatpush.bf16.msra.mxu0 0
      %939 = vmatpush.bf16.msra.mxu0 0
      %940 = vmatpush.bf16.msra.mxu0 0
      %941 = vmatpush.bf16.msra.mxu0 0
      %942 = vmatpush.bf16.msra.mxu0 0
      %943 = vmatpush.bf16.msra.mxu0 %v935
      %944 = vmatpush.bf16.msra.mxu0 %v931
      %945 = vmatmul.bf16.gmra.mxu0 %v304
      %v946 = vpop.f32.mrf.mxu0
      %v947 = vadd.f32 %v916, %v946
      %v948 = vpop.f32.mrf.mxu0
      %v949 = vadd.f32 %v918, %v948
      %950 = vmatmul.bf16.gmra.mxu0 %v307
      %v951 = vpop.f32.mrf.mxu0
      %v952 = vadd.f32 %v921, %v951
      %v953 = vpop.f32.mrf.mxu0
      %v954 = vadd.f32 %v923, %v953
      %955 = vdwg.mxu0
      %v956 = vmul.f32 %v947, %v335
      %v957 = vmul.f32 %v949, %v340
      %v958 = vmul.f32 %v952, %v345
      %v959 = vmul.f32 %v954, %v350
      %v960 = vadd.f32 %v956, %v359
      %v961 = vadd.f32 %v957, %v364
      %v962 = vadd.f32 %v958, %v369
      %v963 = vadd.f32 %v959, %v374
      %v964 = vmax.f32 %v960, 0.0
      %v965 = vmax.f32 %v961, 0.0
      %v966 = vmax.f32 %v962, 0.0
      %v967 = vmax.f32 %v963, 0.0
      %972 = vrot.lane.b32.xlu0 %v964, 48
      %v973 = vpop.permute.xlu0 %972
      %974 = vrot.lane.b32.xlu0 %v965, 48
      %v975 = vpop.permute.xlu0 %974
      %976 = vrot.lane.b32.xlu0 %v966, 48
      %v977 = vpop.permute.xlu0 %976
      %978 = vrot.lane.b32.xlu0 %v967, 48
      %v979 = vpop.permute.xlu0 %978
      %vm984 = vcmask 458112
      %985 = vst.msk [vmem:[%s217] sm:$0xff] %vm984, %v973
      %986 = vst.msk [vmem:[%s217 + $0x8] sm:$0xff] %vm984, %v975
      %987 = vst.msk [vmem:[%s217 + $0x10] sm:$0xff] %vm984, %v977
      %988 = vst.msk [vmem:[%s217 + $0x18] sm:$0xff] %vm984, %v979
      %v989 = vld [vmem:[%s895] sm:$0xf]
      %v990 = vld [vmem:[%s895 + $0x4] sm:$0xf]
      %v991 = vld [vmem:[%s895 + $0x8] sm:$0xf]
      %s992 = sadd.s32 %s219, 8
      %s993 = smul.u32 %s992, 3
      %s994 = smul.addr %s993, 4
      %s995 = scalar_lea.vmem %s209, %s994
      %v996 = vld [vmem:[%s995] sm:$0xf]
      %v997 = vld [vmem:[%s995 + $0x4] sm:$0x3]
      %v1000 = vunpack.c.l.b16 %v996
      %v1001 = vunpack.c.l.b16 %v997
      %v1002 = vpack.c.b16 %v1001, %v1000
      %v1004 = vsel %vm270, %v1002, 0
      %1006 = vmatpush.bf16.msra.mxu0 0
      %1007 = vmatpush.bf16.msra.mxu0 0
      %1008 = vmatpush.bf16.msra.mxu0 0
      %1009 = vmatpush.bf16.msra.mxu0 0
      %1010 = vmatpush.bf16.msra.mxu0 0
      %1011 = vmatpush.bf16.msra.mxu0 0
      %1012 = vmatpush.bf16.msra.mxu0 0
      %1013 = vmatpush.bf16.msra.mxu0 %v1004
      %1014 = vmatmul.bf16.gmra.mxu0 %v265
      %v1015 = vpop.f32.mrf.mxu0
      %v1016 = vadd.f32 0.0, %v1015
      %v1017 = vpop.f32.mrf.mxu0
      %v1018 = vadd.f32 0.0, %v1017
      %1019 = vmatmul.bf16.gmra.mxu0 %v268
      %v1020 = vpop.f32.mrf.mxu0
      %v1021 = vadd.f32 0.0, %v1020
      %v1022 = vpop.f32.mrf.mxu0
      %v1023 = vadd.f32 0.0, %v1022
      %1024 = vdwg.mxu0
      %v1028 = vunpack.c.l.b16 %v989
      %v1029 = vunpack.c.l.b16 %v990
      %v1030 = vunpack.c.l.b16 %v991
      %v1031 = vpack.c.b16 %v1029, %v1028
      %v1032 = vpack.c.b16 %v1030, %v1030
      %v1035 = vsel %vm309, %v1032, 0
      %1037 = vmatpush.bf16.msra.mxu0 0
      %1038 = vmatpush.bf16.msra.mxu0 0
      %1039 = vmatpush.bf16.msra.mxu0 0
      %1040 = vmatpush.bf16.msra.mxu0 0
      %1041 = vmatpush.bf16.msra.mxu0 0
      %1042 = vmatpush.bf16.msra.mxu0 0
      %1043 = vmatpush.bf16.msra.mxu0 %v1035
      %1044 = vmatpush.bf16.msra.mxu0 %v1031
      %1045 = vmatmul.bf16.gmra.mxu0 %v304
      %v1046 = vpop.f32.mrf.mxu0
      %v1047 = vadd.f32 %v1016, %v1046
      %v1048 = vpop.f32.mrf.mxu0
      %v1049 = vadd.f32 %v1018, %v1048
      %1050 = vmatmul.bf16.gmra.mxu0 %v307
      %v1051 = vpop.f32.mrf.mxu0
      %v1052 = vadd.f32 %v1021, %v1051
      %v1053 = vpop.f32.mrf.mxu0
      %v1054 = vadd.f32 %v1023, %v1053
      %1055 = vdwg.mxu0
      %v1056 = vmul.f32 %v1047, %v335
      %v1057 = vmul.f32 %v1049, %v340
      %v1058 = vmul.f32 %v1052, %v345
      %v1059 = vmul.f32 %v1054, %v350
      %v1060 = vadd.f32 %v1056, %v359
      %v1061 = vadd.f32 %v1057, %v364
      %v1062 = vadd.f32 %v1058, %v369
      %v1063 = vadd.f32 %v1059, %v374
      %v1064 = vmax.f32 %v1060, 0.0
      %v1065 = vmax.f32 %v1061, 0.0
      %v1066 = vmax.f32 %v1062, 0.0
      %v1067 = vmax.f32 %v1063, 0.0
      %1072 = vrot.lane.b32.xlu0 %v1064, 56
      %v1073 = vpop.permute.xlu0 %1072
      %1074 = vrot.lane.b32.xlu0 %v1065, 56
      %v1075 = vpop.permute.xlu0 %1074
      %1076 = vrot.lane.b32.xlu0 %v1066, 56
      %v1077 = vpop.permute.xlu0 %1076
      %1078 = vrot.lane.b32.xlu0 %v1067, 56
      %v1079 = vpop.permute.xlu0 %1078
      %vm1084 = vcmask 523712
      %1085 = vst.msk [vmem:[%s217] sm:$0xff] %vm1084, %v1073
      %1086 = vst.msk [vmem:[%s217 + $0x8] sm:$0xff] %vm1084, %v1075
      %1087 = vst.msk [vmem:[%s217 + $0x10] sm:$0xff] %vm1084, %v1077
      %1088 = vst.msk [vmem:[%s217 + $0x18] sm:$0xff] %vm1084, %v1079
      %p1089 = scmp.lt.s32.totalorder %s19, 1
      %s1090 = scalar_select %p1089, %s19, 1
      %p1091 = scmp.lt.s32.totalorder %s20, 0
      %s1092 = scalar_select %p1091, %s20, 0
      %s1093 = smul.addr %s1090, 4
      %s1094 = sadd.s32 %s1092, %s1093
      %s1095 = smul.addr %s1094, 8
      %s1096 = scalar_lea.vmem %s4, %s1095
      // Predicated region
      $region37: #{_lambda_.3} parent=35 // pred_check
        %p1097 = pneg %p136
      $region38: #{_lambda_.3} parent=35 // pred_check_branch
        %1099 = sbr.rel (%p1097) target = $region40
      $region39: #{_lambda_.3} parent=35 // pred_region
        _
      $region40: #{_lambda_.3} parent=35 // pred_fallthru
        _
    $region36: #{_lambda_.3} parent=5 // pred_fallthru
      _
    %p1100 = scmp.le.s32.totalorder 2, %s10
    // Predicated region
    $region41: #{_lambda_.3} parent=5 // pred_check
      %p1101 = pneg %p1100
    $region42: #{_lambda_.3} parent=5 // pred_check_branch
      %1103 = sbr.rel (%p1101) target = $region44
    $region43: #{_lambda_.3} parent=5 // pred_region
      %s1104 = ssub.s32 %s10, 2
      // Predicated region
      $region45: #{_lambda_.3} parent=43 // pred_check
        %p1105 = pneg %p142
      $region46: #{_lambda_.3} parent=43 // pred_check_branch
        %1107 = sbr.rel (%p1105) target = $region48
      $region47: #{_lambda_.3} parent=43 // pred_region
        %p1108 = scmp.lt.s32.totalorder %s21, 1
        %s1109 = scalar_select %p1108, %s21, 1
        %p1110 = scmp.lt.s32.totalorder %s22, 0
        %s1111 = scalar_select %p1110, %s22, 0
        %s1112 = smul.addr %s1109, 4
        %s1113 = sadd.s32 %s1111, %s1112
        %s1114 = smul.addr %s1113, 8
        %s1115 = scalar_lea.vmem %s4, %s1114
      $region48: #{_lambda_.3} parent=43 // pred_fallthru
        _
    $region44: #{_lambda_.3} parent=5 // pred_fallthru
      _
  $region6: #{_lambda_.3} parent=0 // loop_footer
    %s14 = sadd.s32 1, %s10
  $region7: #{_lambda_.3} parent=0 // loop_footer_branch
    %9 = sbr.rel target = $region3
  $region8: #{_lambda_.3} parent=0 // loop_exit
    _

</llo_original>
